<compile_context>
chip_gen: v7x
topology: tpu7x:2x2x1
jax: 0.10.0
libtpu: 0.0.40
codegen_flags: <defaults>
</compile_context>

<pallas_src>
import functools

import jax
import jax.numpy as jnp
from jax.experimental import pallas as pl
from jax.experimental.pallas import tpu as pltpu  # noqa: F401  (used when scaling up: CompilerParams)


def _tree_sum(terms):
    """Balanced pairwise sum -> O(log N) dependent adds instead of a serial chain."""
    while len(terms) > 1:
        nxt = [terms[i] + terms[i + 1] for i in range(0, len(terms) - 1, 2)]
        if len(terms) % 2:
            nxt.append(terms[-1])
        terms = nxt
    return terms[0]


def lstm_kernel(x_ref, w_ih_ref, w_hh_ref, b_ref, w_hr_ref, out_ref, *,
                seq_len, input_size, min_seq_len):
    """Whole-sequence stacked projected LSTM, one kernel invocation.

    x_ref    : (B, S*D)        lane-dense input sequence (time-major within the lane axis)
    w_ih_ref : (L, D, 4H)      input->gates weights, pre-transposed, i/f/o cols pre-scaled by 0.5
    w_hh_ref : (L, D, 4H)      projected-hidden->gates weights, same pre-scaling
    b_ref    : (L, 1, 4H)      combined bias (b_ih + b_hh), same pre-scaling
    w_hr_ref : (L, D, H)       hidden->projection weights (PyTorch weight_hr layout)
    out_ref  : (B, S_out*D)    lane-dense projected hidden of last layer for t >= min_seq_len
    """
    B = x_ref.shape[0]
    S, D = seq_len, input_size
    L, _, four_h = w_ih_ref.shape
    H = four_h // 4

    # Load everything once; subsequent work is pure VPU/EUP/XLU register work.
    x_all = x_ref[...]          # (B, S*D)
    w_ih = w_ih_ref[...]        # (L, D, 4H)
    w_hh = w_hh_ref[...]        # (L, D, 4H)
    bias = b_ref[...]           # (L, 1, 4H)
    w_hr = w_hr_ref[...]        # (L, D, H)

    # Hoist per-layer broadcast rows out of the (unrolled) time loop
    # (broadcast_in_dim is not CSE'd by JAX).
    w_ih_rows = [[w_ih[l][k:k + 1] for k in range(D)] for l in range(L)]   # each (1, 4H)
    w_hh_rows = [[w_hh[l][k:k + 1] for k in range(D)] for l in range(L)]   # each (1, 4H)
    w_hr_rows = [[w_hr[l][d:d + 1] for d in range(D)] for l in range(L)]   # each (1, H)
    b_rows = [bias[l] for l in range(L)]                                   # each (1, 4H)

    h = [jnp.zeros((B, D), jnp.float32) for _ in range(L)]   # projected-hidden carry
    c = [jnp.zeros((B, H), jnp.float32) for _ in range(L)]   # cell-state carry

    outs = []
    for t in range(S):
        x = x_all[:, t * D:(t + 1) * D]                      # (B, D)
        for l in range(L):
            if D <= 8:
                # Tiny K/N: keep the recurrence off the MXU (push/pop latency would
                # dominate, especially through the MRF on v5e/v6e).  Tree-reduce keeps the
                # dependent-FMA chain O(log D).
                terms = [b_rows[l]]
                terms += [x[:, k:k + 1] * w_ih_rows[l][k] for k in range(D)]
                terms += [h[l][:, k:k + 1] * w_hh_rows[l][k] for k in range(D)]
                gates = _tree_sum(terms)                     # (B, 4H), pre-scaled
            else:
                # Wider inputs: one MXU matmul keeps recurrence latency flat in D.
                gates = (b_rows[l]
                         + jnp.dot(x, w_ih[l], preferred_element_type=jnp.float32)
                         + jnp.dot(h[l], w_hh[l], preferred_element_type=jnp.float32))

            # ONE full-width EUP pass: tanh over the whole gate tile.  Because the i/f/o
            # columns were pre-scaled by 0.5, sigmoid(z) = 0.5*tanh(z/2) + 0.5 is a single
            # VPU FMA; g = tanh(z_g) comes straight from the tanh output.
            tg = jnp.tanh(gates)                             # (B, 4H)
            sg = 0.5 * tg + 0.5                              # (B, 4H) (g quarter unused)
            i_g = sg[:, 0:H]
            f_g = sg[:, H:2 * H]
            g_g = tg[:, 2 * H:3 * H]
            o_g = sg[:, 3 * H:4 * H]

            c_new = f_g * c[l] + i_g * g_g                   # (B, H)
            h_full = o_g * jnp.tanh(c_new)                   # (B, H)  (narrow EUP pass)

            if D <= 8:
                # Projection h_full @ W_hr^T: VPU multiply + lane (XLU) reduction per column.
                cols = [jnp.sum(h_full * w_hr_rows[l][d], axis=-1, keepdims=True)
                        for d in range(D)]                   # each (B, 1)
                x = cols[0] if D == 1 else jnp.concatenate(cols, axis=-1)
            else:
                x = jnp.dot(h_full, jnp.transpose(w_hr[l]),
                            preferred_element_type=jnp.float32)
            c[l] = c_new
            h[l] = x
        if t >= min_seq_len:
            outs.append(x)                                   # keep in registers

    # Single lane-dense store (time-major then feature) -> one HBM writeback at kernel end.
    out_ref[...] = jnp.concatenate(outs, axis=-1).astype(out_ref.dtype)


def lstm_benchmark_forward(y, kernel_params, min_seq_len=1):
    """y: (B, S, D) float32, batch_first (PyTorch layout). Returns (B, S - min_seq_len, D)."""
    w_ih_t, w_hh_t, b, w_hr = kernel_params
    B, S, D = y.shape
    S_out = S - min_seq_len
    # Grid-less: one kernel invocation; all operands are full resident VMEM blocks.
    out2d = pl.pallas_call(
        functools.partial(lstm_kernel, seq_len=S, input_size=D, min_seq_len=min_seq_len),
        out_shape=jax.ShapeDtypeStruct((B, S_out * D), jnp.float32),
    )(y.astype(jnp.float32).reshape(B, S * D), w_ih_t, w_hh_t, b, w_hr)
    return out2d.reshape(B, S_out, D)


def init_params(key, hidden_size, input_size, layers):
    """Raw PyTorch-layout nn.LSTM(proj_size=input_size) parameters, U(-k, k), k=1/sqrt(H)."""
    H, D, L = hidden_size, input_size, layers
    k = 1.0 / jnp.sqrt(jnp.float32(H))
    keys = jax.random.split(key, 5)
    w_ih = jax.random.uniform(keys[0], (L, 4 * H, D), jnp.float32, -k, k)   # weight_ih_l{l}
    w_hh = jax.random.uniform(keys[1], (L, 4 * H, D), jnp.float32, -k, k)   # weight_hh_l{l}
    b_ih = jax.random.uniform(keys[2], (L, 4 * H), jnp.float32, -k, k)      # bias_ih_l{l}
    b_hh = jax.random.uniform(keys[3], (L, 4 * H), jnp.float32, -k, k)      # bias_hh_l{l}
    w_hr = jax.random.uniform(keys[4], (L, D, H), jnp.float32, -k, k)       # weight_hr_l{l}
    return w_ih, w_hh, b_ih, b_hh, w_hr


def pack_params(raw_params, hidden_size):
    """Kernel packing: transpose gate weights, fold biases, pre-scale i/f/o columns by 0.5
    so sigmoid can be recovered from a single tanh pass (sigmoid(z) = 0.5*tanh(z/2)+0.5)."""
    w_ih, w_hh, b_ih, b_hh, w_hr = raw_params
    H = hidden_size
    scale = jnp.concatenate([jnp.full((H,), 0.5, jnp.float32),   # i
                             jnp.full((H,), 0.5, jnp.float32),   # f
                             jnp.ones((H,), jnp.float32),        # g (tanh, unscaled)
                             jnp.full((H,), 0.5, jnp.float32)])  # o
    w_ih_t = jnp.transpose(w_ih, (0, 2, 1)) * scale              # (L, D, 4H)
    w_hh_t = jnp.transpose(w_hh, (0, 2, 1)) * scale              # (L, D, 4H)
    b = ((b_ih + b_hh) * scale)[:, None, :]                      # (L, 1, 4H)
    return w_ih_t, w_hh_t, b, w_hr                               # w_hr stays (L, D, H)


def lstm_reference(y, raw_params, min_seq_len=1):
    """Pure-JAX reference with PyTorch nn.LSTM(proj_size) semantics on the RAW parameters."""
    w_ih, w_hh, b_ih, b_hh, w_hr = raw_params
    B, S, D = y.shape
    L, four_h, _ = w_ih.shape
    H = four_h // 4
    h = jnp.zeros((L, B, D), jnp.float32)
    c = jnp.zeros((L, B, H), jnp.float32)
    outs = []
    for t in range(S):
        x = y[:, t].astype(jnp.float32)
        for l in range(L):
            gates = x @ w_ih[l].T + h[l] @ w_hh[l].T + b_ih[l] + b_hh[l]
            i = jax.nn.sigmoid(gates[:, 0:H])
            f = jax.nn.sigmoid(gates[:, H:2 * H])
            g = jnp.tanh(gates[:, 2 * H:3 * H])
            o = jax.nn.sigmoid(gates[:, 3 * H:4 * H])
            c_new = f * c[l] + i * g
            x = (o * jnp.tanh(c_new)) @ w_hr[l].T
            h = h.at[l].set(x)
            c = c.at[l].set(c_new)
        outs.append(x)
    out = jnp.stack(outs, axis=1)  # (B, S, D)
    return out[:, min_seq_len:]


if __name__ == "__main__":
    # Module-default shapes: LSTMBenchmark(hidden_size=64, input_size=1, layers=4,
    # dropout=0.0) applied to y of shape (batch=2, seq=8, 1), min_seq_len=1.
    hidden_size, input_size, layers = 64, 1, 4
    batch, seq, min_seq_len = 2, 8, 1

    key = jax.random.PRNGKey(0)
    k_param, k_data = jax.random.split(key)
    raw_params = init_params(k_param, hidden_size, input_size, layers)
    kernel_params = pack_params(raw_params, hidden_size)
    y = jax.random.normal(k_data, (batch, seq, input_size), jnp.float32)

    fwd = jax.jit(functools.partial(lstm_benchmark_forward, min_seq_len=min_seq_len))
    out = jax.block_until_ready(fwd(y, kernel_params))

    ref = lstm_reference(y, raw_params, min_seq_len=min_seq_len)
    assert out.shape == (batch, seq - min_seq_len, input_size), out.shape
    assert jnp.allclose(out, ref, atol=1e-4, rtol=1e-4), float(jnp.max(jnp.abs(out - ref)))

    print("KERNEL_OK")
</pallas_src>

<mosaic_0001>
module attributes {stable_mosaic.version = 11 : i64} {
  func.func @lstm_kernel(%arg0: memref<2x8xf32, #tpu.memory_space<vmem>>, %arg1: memref<4x1x256xf32, #tpu.memory_space<vmem>>, %arg2: memref<4x1x256xf32, #tpu.memory_space<vmem>>, %arg3: memref<4x1x256xf32, #tpu.memory_space<vmem>>, %arg4: memref<4x1x64xf32, #tpu.memory_space<vmem>>, %arg5: memref<2x7xf32, #tpu.memory_space<vmem>>) attributes {dimension_semantics = [], scalar_prefetch = 0 : i64, scratch_operands = 0 : i64, tpu.core_type = #tpu.core_type<tc>} {
    %c0 = arith.constant 0 : index
    %c0_0 = arith.constant 0 : index
    %0 = vector.load %arg0[%c0, %c0_0] : memref<2x8xf32, #tpu.memory_space<vmem>>, vector<2x8xf32>
    %c0_1 = arith.constant 0 : index
    %c0_2 = arith.constant 0 : index
    %c0_3 = arith.constant 0 : index
    %1 = vector.load %arg1[%c0_1, %c0_2, %c0_3] : memref<4x1x256xf32, #tpu.memory_space<vmem>>, vector<4x1x256xf32>
    %c0_4 = arith.constant 0 : index
    %c0_5 = arith.constant 0 : index
    %c0_6 = arith.constant 0 : index
    %2 = vector.load %arg2[%c0_4, %c0_5, %c0_6] : memref<4x1x256xf32, #tpu.memory_space<vmem>>, vector<4x1x256xf32>
    %c0_7 = arith.constant 0 : index
    %c0_8 = arith.constant 0 : index
    %c0_9 = arith.constant 0 : index
    %3 = vector.load %arg3[%c0_7, %c0_8, %c0_9] : memref<4x1x256xf32, #tpu.memory_space<vmem>>, vector<4x1x256xf32>
    %c0_10 = arith.constant 0 : index
    %c0_11 = arith.constant 0 : index
    %c0_12 = arith.constant 0 : index
    %4 = vector.load %arg4[%c0_10, %c0_11, %c0_12] : memref<4x1x64xf32, #tpu.memory_space<vmem>>, vector<4x1x64xf32>
    %5 = vector.extract_strided_slice %1 {offsets = [0, 0, 0], sizes = [1, 1, 256], strides = [1, 1, 1]} : vector<4x1x256xf32> to vector<1x1x256xf32>
    %6 = vector.shape_cast %5 : vector<1x1x256xf32> to vector<1x256xf32>
    %7 = vector.extract_strided_slice %1 {offsets = [1, 0, 0], sizes = [1, 1, 256], strides = [1, 1, 1]} : vector<4x1x256xf32> to vector<1x1x256xf32>
    %8 = vector.shape_cast %7 : vector<1x1x256xf32> to vector<1x256xf32>
    %9 = vector.extract_strided_slice %1 {offsets = [2, 0, 0], sizes = [1, 1, 256], strides = [1, 1, 1]} : vector<4x1x256xf32> to vector<1x1x256xf32>
    %10 = vector.shape_cast %9 : vector<1x1x256xf32> to vector<1x256xf32>
    %11 = vector.extract_strided_slice %1 {offsets = [3, 0, 0], sizes = [1, 1, 256], strides = [1, 1, 1]} : vector<4x1x256xf32> to vector<1x1x256xf32>
    %12 = vector.shape_cast %11 : vector<1x1x256xf32> to vector<1x256xf32>
    %13 = vector.extract_strided_slice %2 {offsets = [0, 0, 0], sizes = [1, 1, 256], strides = [1, 1, 1]} : vector<4x1x256xf32> to vector<1x1x256xf32>
    %14 = vector.shape_cast %13 : vector<1x1x256xf32> to vector<1x256xf32>
    %15 = vector.extract_strided_slice %2 {offsets = [1, 0, 0], sizes = [1, 1, 256], strides = [1, 1, 1]} : vector<4x1x256xf32> to vector<1x1x256xf32>
    %16 = vector.shape_cast %15 : vector<1x1x256xf32> to vector<1x256xf32>
    %17 = vector.extract_strided_slice %2 {offsets = [2, 0, 0], sizes = [1, 1, 256], strides = [1, 1, 1]} : vector<4x1x256xf32> to vector<1x1x256xf32>
    %18 = vector.shape_cast %17 : vector<1x1x256xf32> to vector<1x256xf32>
    %19 = vector.extract_strided_slice %2 {offsets = [3, 0, 0], sizes = [1, 1, 256], strides = [1, 1, 1]} : vector<4x1x256xf32> to vector<1x1x256xf32>
    %20 = vector.shape_cast %19 : vector<1x1x256xf32> to vector<1x256xf32>
    %21 = vector.extract_strided_slice %4 {offsets = [0, 0, 0], sizes = [1, 1, 64], strides = [1, 1, 1]} : vector<4x1x64xf32> to vector<1x1x64xf32>
    %22 = vector.shape_cast %21 : vector<1x1x64xf32> to vector<1x64xf32>
    %23 = vector.extract_strided_slice %4 {offsets = [1, 0, 0], sizes = [1, 1, 64], strides = [1, 1, 1]} : vector<4x1x64xf32> to vector<1x1x64xf32>
    %24 = vector.shape_cast %23 : vector<1x1x64xf32> to vector<1x64xf32>
    %25 = vector.extract_strided_slice %4 {offsets = [2, 0, 0], sizes = [1, 1, 64], strides = [1, 1, 1]} : vector<4x1x64xf32> to vector<1x1x64xf32>
    %26 = vector.shape_cast %25 : vector<1x1x64xf32> to vector<1x64xf32>
    %27 = vector.extract_strided_slice %4 {offsets = [3, 0, 0], sizes = [1, 1, 64], strides = [1, 1, 1]} : vector<4x1x64xf32> to vector<1x1x64xf32>
    %28 = vector.shape_cast %27 : vector<1x1x64xf32> to vector<1x64xf32>
    %29 = vector.extract_strided_slice %3 {offsets = [0, 0, 0], sizes = [1, 1, 256], strides = [1, 1, 1]} : vector<4x1x256xf32> to vector<1x1x256xf32>
    %30 = vector.shape_cast %29 : vector<1x1x256xf32> to vector<1x256xf32>
    %31 = vector.extract_strided_slice %3 {offsets = [1, 0, 0], sizes = [1, 1, 256], strides = [1, 1, 1]} : vector<4x1x256xf32> to vector<1x1x256xf32>
    %32 = vector.shape_cast %31 : vector<1x1x256xf32> to vector<1x256xf32>
    %33 = vector.extract_strided_slice %3 {offsets = [2, 0, 0], sizes = [1, 1, 256], strides = [1, 1, 1]} : vector<4x1x256xf32> to vector<1x1x256xf32>
    %34 = vector.shape_cast %33 : vector<1x1x256xf32> to vector<1x256xf32>
    %35 = vector.extract_strided_slice %3 {offsets = [3, 0, 0], sizes = [1, 1, 256], strides = [1, 1, 1]} : vector<4x1x256xf32> to vector<1x1x256xf32>
    %36 = vector.shape_cast %35 : vector<1x1x256xf32> to vector<1x256xf32>
    %cst = arith.constant 0.000000e+00 : f32
    %37 = vector.broadcast %cst : f32 to vector<2x1xf32>
    %cst_13 = arith.constant 0.000000e+00 : f32
    %38 = vector.broadcast %cst_13 : f32 to vector<2x1xf32>
    %cst_14 = arith.constant 0.000000e+00 : f32
    %39 = vector.broadcast %cst_14 : f32 to vector<2x1xf32>
    %cst_15 = arith.constant 0.000000e+00 : f32
    %40 = vector.broadcast %cst_15 : f32 to vector<2x1xf32>
    %cst_16 = arith.constant 0.000000e+00 : f32
    %41 = vector.broadcast %cst_16 : f32 to vector<2x64xf32>
    %cst_17 = arith.constant 0.000000e+00 : f32
    %42 = vector.broadcast %cst_17 : f32 to vector<2x64xf32>
    %cst_18 = arith.constant 0.000000e+00 : f32
    %43 = vector.broadcast %cst_18 : f32 to vector<2x64xf32>
    %cst_19 = arith.constant 0.000000e+00 : f32
    %44 = vector.broadcast %cst_19 : f32 to vector<2x64xf32>
    %45 = vector.extract_strided_slice %0 {offsets = [0, 0], sizes = [2, 1], strides = [1, 1]} : vector<2x8xf32> to vector<2x1xf32>
    %46 = vector.broadcast %45 : vector<2x1xf32> to vector<2x256xf32>
    %47 = vector.broadcast %6 : vector<1x256xf32> to vector<2x256xf32>
    %48 = arith.mulf %46, %47 : vector<2x256xf32>
    %49 = vector.broadcast %37 : vector<2x1xf32> to vector<2x256xf32>
    %50 = vector.broadcast %14 : vector<1x256xf32> to vector<2x256xf32>
    %51 = arith.mulf %49, %50 : vector<2x256xf32>
    %52 = vector.broadcast %30 : vector<1x256xf32> to vector<2x256xf32>
    %53 = arith.addf %52, %48 : vector<2x256xf32>
    %54 = arith.addf %53, %51 : vector<2x256xf32>
    %55 = math.tanh %54 : vector<2x256xf32>
    %cst_20 = arith.constant 5.000000e-01 : f32
    %56 = vector.broadcast %cst_20 : f32 to vector<2x256xf32>
    %57 = arith.mulf %56, %55 : vector<2x256xf32>
    %cst_21 = arith.constant 5.000000e-01 : f32
    %58 = vector.broadcast %cst_21 : f32 to vector<2x256xf32>
    %59 = arith.addf %57, %58 : vector<2x256xf32>
    %60 = vector.extract_strided_slice %59 {offsets = [0, 0], sizes = [2, 64], strides = [1, 1]} : vector<2x256xf32> to vector<2x64xf32>
    %61 = vector.extract_strided_slice %59 {offsets = [0, 64], sizes = [2, 64], strides = [1, 1]} : vector<2x256xf32> to vector<2x64xf32>
    %62 = vector.extract_strided_slice %55 {offsets = [0, 128], sizes = [2, 64], strides = [1, 1]} : vector<2x256xf32> to vector<2x64xf32>
    %63 = vector.extract_strided_slice %59 {offsets = [0, 192], sizes = [2, 64], strides = [1, 1]} : vector<2x256xf32> to vector<2x64xf32>
    %64 = arith.mulf %61, %41 : vector<2x64xf32>
    %65 = arith.mulf %60, %62 : vector<2x64xf32>
    %66 = arith.addf %64, %65 : vector<2x64xf32>
    %67 = math.tanh %66 : vector<2x64xf32>
    %68 = arith.mulf %63, %67 : vector<2x64xf32>
    %69 = vector.broadcast %22 : vector<1x64xf32> to vector<2x64xf32>
    %70 = arith.mulf %68, %69 : vector<2x64xf32>
    %cst_22 = arith.constant dense<0.000000e+00> : vector<2xf32>
    %71 = vector.multi_reduction <add>, %70, %cst_22 [1] : vector<2x64xf32> to vector<2xf32>
    %72 = vector.shape_cast %71 : vector<2xf32> to vector<2x1xf32>
    %73 = vector.broadcast %72 : vector<2x1xf32> to vector<2x256xf32>
    %74 = vector.broadcast %8 : vector<1x256xf32> to vector<2x256xf32>
    %75 = arith.mulf %73, %74 : vector<2x256xf32>
    %76 = vector.broadcast %38 : vector<2x1xf32> to vector<2x256xf32>
    %77 = vector.broadcast %16 : vector<1x256xf32> to vector<2x256xf32>
    %78 = arith.mulf %76, %77 : vector<2x256xf32>
    %79 = vector.broadcast %32 : vector<1x256xf32> to vector<2x256xf32>
    %80 = arith.addf %79, %75 : vector<2x256xf32>
    %81 = arith.addf %80, %78 : vector<2x256xf32>
    %82 = math.tanh %81 : vector<2x256xf32>
    %cst_23 = arith.constant 5.000000e-01 : f32
    %83 = vector.broadcast %cst_23 : f32 to vector<2x256xf32>
    %84 = arith.mulf %83, %82 : vector<2x256xf32>
    %cst_24 = arith.constant 5.000000e-01 : f32
    %85 = vector.broadcast %cst_24 : f32 to vector<2x256xf32>
    %86 = arith.addf %84, %85 : vector<2x256xf32>
    %87 = vector.extract_strided_slice %86 {offsets = [0, 0], sizes = [2, 64], strides = [1, 1]} : vector<2x256xf32> to vector<2x64xf32>
    %88 = vector.extract_strided_slice %86 {offsets = [0, 64], sizes = [2, 64], strides = [1, 1]} : vector<2x256xf32> to vector<2x64xf32>
    %89 = vector.extract_strided_slice %82 {offsets = [0, 128], sizes = [2, 64], strides = [1, 1]} : vector<2x256xf32> to vector<2x64xf32>
    %90 = vector.extract_strided_slice %86 {offsets = [0, 192], sizes = [2, 64], strides = [1, 1]} : vector<2x256xf32> to vector<2x64xf32>
    %91 = arith.mulf %88, %42 : vector<2x64xf32>
    %92 = arith.mulf %87, %89 : vector<2x64xf32>
    %93 = arith.addf %91, %92 : vector<2x64xf32>
    %94 = math.tanh %93 : vector<2x64xf32>
    %95 = arith.mulf %90, %94 : vector<2x64xf32>
    %96 = vector.broadcast %24 : vector<1x64xf32> to vector<2x64xf32>
    %97 = arith.mulf %95, %96 : vector<2x64xf32>
    %cst_25 = arith.constant dense<0.000000e+00> : vector<2xf32>
    %98 = vector.multi_reduction <add>, %97, %cst_25 [1] : vector<2x64xf32> to vector<2xf32>
    %99 = vector.shape_cast %98 : vector<2xf32> to vector<2x1xf32>
    %100 = vector.broadcast %99 : vector<2x1xf32> to vector<2x256xf32>
    %101 = vector.broadcast %10 : vector<1x256xf32> to vector<2x256xf32>
    %102 = arith.mulf %100, %101 : vector<2x256xf32>
    %103 = vector.broadcast %39 : vector<2x1xf32> to vector<2x256xf32>
    %104 = vector.broadcast %18 : vector<1x256xf32> to vector<2x256xf32>
    %105 = arith.mulf %103, %104 : vector<2x256xf32>
    %106 = vector.broadcast %34 : vector<1x256xf32> to vector<2x256xf32>
    %107 = arith.addf %106, %102 : vector<2x256xf32>
    %108 = arith.addf %107, %105 : vector<2x256xf32>
    %109 = math.tanh %108 : vector<2x256xf32>
    %cst_26 = arith.constant 5.000000e-01 : f32
    %110 = vector.broadcast %cst_26 : f32 to vector<2x256xf32>
    %111 = arith.mulf %110, %109 : vector<2x256xf32>
    %cst_27 = arith.constant 5.000000e-01 : f32
    %112 = vector.broadcast %cst_27 : f32 to vector<2x256xf32>
    %113 = arith.addf %111, %112 : vector<2x256xf32>
    %114 = vector.extract_strided_slice %113 {offsets = [0, 0], sizes = [2, 64], strides = [1, 1]} : vector<2x256xf32> to vector<2x64xf32>
    %115 = vector.extract_strided_slice %113 {offsets = [0, 64], sizes = [2, 64], strides = [1, 1]} : vector<2x256xf32> to vector<2x64xf32>
    %116 = vector.extract_strided_slice %109 {offsets = [0, 128], sizes = [2, 64], strides = [1, 1]} : vector<2x256xf32> to vector<2x64xf32>
    %117 = vector.extract_strided_slice %113 {offsets = [0, 192], sizes = [2, 64], strides = [1, 1]} : vector<2x256xf32> to vector<2x64xf32>
    %118 = arith.mulf %115, %43 : vector<2x64xf32>
    %119 = arith.mulf %114, %116 : vector<2x64xf32>
    %120 = arith.addf %118, %119 : vector<2x64xf32>
    %121 = math.tanh %120 : vector<2x64xf32>
    %122 = arith.mulf %117, %121 : vector<2x64xf32>
    %123 = vector.broadcast %26 : vector<1x64xf32> to vector<2x64xf32>
    %124 = arith.mulf %122, %123 : vector<2x64xf32>
    %cst_28 = arith.constant dense<0.000000e+00> : vector<2xf32>
    %125 = vector.multi_reduction <add>, %124, %cst_28 [1] : vector<2x64xf32> to vector<2xf32>
    %126 = vector.shape_cast %125 : vector<2xf32> to vector<2x1xf32>
    %127 = vector.broadcast %126 : vector<2x1xf32> to vector<2x256xf32>
    %128 = vector.broadcast %12 : vector<1x256xf32> to vector<2x256xf32>
    %129 = arith.mulf %127, %128 : vector<2x256xf32>
    %130 = vector.broadcast %40 : vector<2x1xf32> to vector<2x256xf32>
    %131 = vector.broadcast %20 : vector<1x256xf32> to vector<2x256xf32>
    %132 = arith.mulf %130, %131 : vector<2x256xf32>
    %133 = vector.broadcast %36 : vector<1x256xf32> to vector<2x256xf32>
    %134 = arith.addf %133, %129 : vector<2x256xf32>
    %135 = arith.addf %134, %132 : vector<2x256xf32>
    %136 = math.tanh %135 : vector<2x256xf32>
    %cst_29 = arith.constant 5.000000e-01 : f32
    %137 = vector.broadcast %cst_29 : f32 to vector<2x256xf32>
    %138 = arith.mulf %137, %136 : vector<2x256xf32>
    %cst_30 = arith.constant 5.000000e-01 : f32
    %139 = vector.broadcast %cst_30 : f32 to vector<2x256xf32>
    %140 = arith.addf %138, %139 : vector<2x256xf32>
    %141 = vector.extract_strided_slice %140 {offsets = [0, 0], sizes = [2, 64], strides = [1, 1]} : vector<2x256xf32> to vector<2x64xf32>
    %142 = vector.extract_strided_slice %140 {offsets = [0, 64], sizes = [2, 64], strides = [1, 1]} : vector<2x256xf32> to vector<2x64xf32>
    %143 = vector.extract_strided_slice %136 {offsets = [0, 128], sizes = [2, 64], strides = [1, 1]} : vector<2x256xf32> to vector<2x64xf32>
    %144 = vector.extract_strided_slice %140 {offsets = [0, 192], sizes = [2, 64], strides = [1, 1]} : vector<2x256xf32> to vector<2x64xf32>
    %145 = arith.mulf %142, %44 : vector<2x64xf32>
    %146 = arith.mulf %141, %143 : vector<2x64xf32>
    %147 = arith.addf %145, %146 : vector<2x64xf32>
    %148 = math.tanh %147 : vector<2x64xf32>
    %149 = arith.mulf %144, %148 : vector<2x64xf32>
    %150 = vector.broadcast %28 : vector<1x64xf32> to vector<2x64xf32>
    %151 = arith.mulf %149, %150 : vector<2x64xf32>
    %cst_31 = arith.constant dense<0.000000e+00> : vector<2xf32>
    %152 = vector.multi_reduction <add>, %151, %cst_31 [1] : vector<2x64xf32> to vector<2xf32>
    %153 = vector.shape_cast %152 : vector<2xf32> to vector<2x1xf32>
    %154 = vector.extract_strided_slice %0 {offsets = [0, 1], sizes = [2, 1], strides = [1, 1]} : vector<2x8xf32> to vector<2x1xf32>
    %155 = vector.broadcast %154 : vector<2x1xf32> to vector<2x256xf32>
    %156 = vector.broadcast %6 : vector<1x256xf32> to vector<2x256xf32>
    %157 = arith.mulf %155, %156 : vector<2x256xf32>
    %158 = vector.broadcast %72 : vector<2x1xf32> to vector<2x256xf32>
    %159 = vector.broadcast %14 : vector<1x256xf32> to vector<2x256xf32>
    %160 = arith.mulf %158, %159 : vector<2x256xf32>
    %161 = vector.broadcast %30 : vector<1x256xf32> to vector<2x256xf32>
    %162 = arith.addf %161, %157 : vector<2x256xf32>
    %163 = arith.addf %162, %160 : vector<2x256xf32>
    %164 = math.tanh %163 : vector<2x256xf32>
    %cst_32 = arith.constant 5.000000e-01 : f32
    %165 = vector.broadcast %cst_32 : f32 to vector<2x256xf32>
    %166 = arith.mulf %165, %164 : vector<2x256xf32>
    %cst_33 = arith.constant 5.000000e-01 : f32
    %167 = vector.broadcast %cst_33 : f32 to vector<2x256xf32>
    %168 = arith.addf %166, %167 : vector<2x256xf32>
    %169 = vector.extract_strided_slice %168 {offsets = [0, 0], sizes = [2, 64], strides = [1, 1]} : vector<2x256xf32> to vector<2x64xf32>
    %170 = vector.extract_strided_slice %168 {offsets = [0, 64], sizes = [2, 64], strides = [1, 1]} : vector<2x256xf32> to vector<2x64xf32>
    %171 = vector.extract_strided_slice %164 {offsets = [0, 128], sizes = [2, 64], strides = [1, 1]} : vector<2x256xf32> to vector<2x64xf32>
    %172 = vector.extract_strided_slice %168 {offsets = [0, 192], sizes = [2, 64], strides = [1, 1]} : vector<2x256xf32> to vector<2x64xf32>
    %173 = arith.mulf %170, %66 : vector<2x64xf32>
    %174 = arith.mulf %169, %171 : vector<2x64xf32>
    %175 = arith.addf %173, %174 : vector<2x64xf32>
    %176 = math.tanh %175 : vector<2x64xf32>
    %177 = arith.mulf %172, %176 : vector<2x64xf32>
    %178 = vector.broadcast %22 : vector<1x64xf32> to vector<2x64xf32>
    %179 = arith.mulf %177, %178 : vector<2x64xf32>
    %cst_34 = arith.constant dense<0.000000e+00> : vector<2xf32>
    %180 = vector.multi_reduction <add>, %179, %cst_34 [1] : vector<2x64xf32> to vector<2xf32>
    %181 = vector.shape_cast %180 : vector<2xf32> to vector<2x1xf32>
    %182 = vector.broadcast %181 : vector<2x1xf32> to vector<2x256xf32>
    %183 = vector.broadcast %8 : vector<1x256xf32> to vector<2x256xf32>
    %184 = arith.mulf %182, %183 : vector<2x256xf32>
    %185 = vector.broadcast %99 : vector<2x1xf32> to vector<2x256xf32>
    %186 = vector.broadcast %16 : vector<1x256xf32> to vector<2x256xf32>
    %187 = arith.mulf %185, %186 : vector<2x256xf32>
    %188 = vector.broadcast %32 : vector<1x256xf32> to vector<2x256xf32>
    %189 = arith.addf %188, %184 : vector<2x256xf32>
    %190 = arith.addf %189, %187 : vector<2x256xf32>
    %191 = math.tanh %190 : vector<2x256xf32>
    %cst_35 = arith.constant 5.000000e-01 : f32
    %192 = vector.broadcast %cst_35 : f32 to vector<2x256xf32>
    %193 = arith.mulf %192, %191 : vector<2x256xf32>
    %cst_36 = arith.constant 5.000000e-01 : f32
    %194 = vector.broadcast %cst_36 : f32 to vector<2x256xf32>
    %195 = arith.addf %193, %194 : vector<2x256xf32>
    %196 = vector.extract_strided_slice %195 {offsets = [0, 0], sizes = [2, 64], strides = [1, 1]} : vector<2x256xf32> to vector<2x64xf32>
    %197 = vector.extract_strided_slice %195 {offsets = [0, 64], sizes = [2, 64], strides = [1, 1]} : vector<2x256xf32> to vector<2x64xf32>
    %198 = vector.extract_strided_slice %191 {offsets = [0, 128], sizes = [2, 64], strides = [1, 1]} : vector<2x256xf32> to vector<2x64xf32>
    %199 = vector.extract_strided_slice %195 {offsets = [0, 192], sizes = [2, 64], strides = [1, 1]} : vector<2x256xf32> to vector<2x64xf32>
    %200 = arith.mulf %197, %93 : vector<2x64xf32>
    %201 = arith.mulf %196, %198 : vector<2x64xf32>
    %202 = arith.addf %200, %201 : vector<2x64xf32>
    %203 = math.tanh %202 : vector<2x64xf32>
    %204 = arith.mulf %199, %203 : vector<2x64xf32>
    %205 = vector.broadcast %24 : vector<1x64xf32> to vector<2x64xf32>
    %206 = arith.mulf %204, %205 : vector<2x64xf32>
    %cst_37 = arith.constant dense<0.000000e+00> : vector<2xf32>
    %207 = vector.multi_reduction <add>, %206, %cst_37 [1] : vector<2x64xf32> to vector<2xf32>
    %208 = vector.shape_cast %207 : vector<2xf32> to vector<2x1xf32>
    %209 = vector.broadcast %208 : vector<2x1xf32> to vector<2x256xf32>
    %210 = vector.broadcast %10 : vector<1x256xf32> to vector<2x256xf32>
    %211 = arith.mulf %209, %210 : vector<2x256xf32>
    %212 = vector.broadcast %126 : vector<2x1xf32> to vector<2x256xf32>
    %213 = vector.broadcast %18 : vector<1x256xf32> to vector<2x256xf32>
    %214 = arith.mulf %212, %213 : vector<2x256xf32>
    %215 = vector.broadcast %34 : vector<1x256xf32> to vector<2x256xf32>
    %216 = arith.addf %215, %211 : vector<2x256xf32>
    %217 = arith.addf %216, %214 : vector<2x256xf32>
    %218 = math.tanh %217 : vector<2x256xf32>
    %cst_38 = arith.constant 5.000000e-01 : f32
    %219 = vector.broadcast %cst_38 : f32 to vector<2x256xf32>
    %220 = arith.mulf %219, %218 : vector<2x256xf32>
    %cst_39 = arith.constant 5.000000e-01 : f32
    %221 = vector.broadcast %cst_39 : f32 to vector<2x256xf32>
    %222 = arith.addf %220, %221 : vector<2x256xf32>
    %223 = vector.extract_strided_slice %222 {offsets = [0, 0], sizes = [2, 64], strides = [1, 1]} : vector<2x256xf32> to vector<2x64xf32>
    %224 = vector.extract_strided_slice %222 {offsets = [0, 64], sizes = [2, 64], strides = [1, 1]} : vector<2x256xf32> to vector<2x64xf32>
    %225 = vector.extract_strided_slice %218 {offsets = [0, 128], sizes = [2, 64], strides = [1, 1]} : vector<2x256xf32> to vector<2x64xf32>
    %226 = vector.extract_strided_slice %222 {offsets = [0, 192], sizes = [2, 64], strides = [1, 1]} : vector<2x256xf32> to vector<2x64xf32>
    %227 = arith.mulf %224, %120 : vector<2x64xf32>
    %228 = arith.mulf %223, %225 : vector<2x64xf32>
    %229 = arith.addf %227, %228 : vector<2x64xf32>
    %230 = math.tanh %229 : vector<2x64xf32>
    %231 = arith.mulf %226, %230 : vector<2x64xf32>
    %232 = vector.broadcast %26 : vector<1x64xf32> to vector<2x64xf32>
    %233 = arith.mulf %231, %232 : vector<2x64xf32>
    %cst_40 = arith.constant dense<0.000000e+00> : vector<2xf32>
    %234 = vector.multi_reduction <add>, %233, %cst_40 [1] : vector<2x64xf32> to vector<2xf32>
    %235 = vector.shape_cast %234 : vector<2xf32> to vector<2x1xf32>
    %236 = vector.broadcast %235 : vector<2x1xf32> to vector<2x256xf32>
    %237 = vector.broadcast %12 : vector<1x256xf32> to vector<2x256xf32>
    %238 = arith.mulf %236, %237 : vector<2x256xf32>
    %239 = vector.broadcast %153 : vector<2x1xf32> to vector<2x256xf32>
    %240 = vector.broadcast %20 : vector<1x256xf32> to vector<2x256xf32>
    %241 = arith.mulf %239, %240 : vector<2x256xf32>
    %242 = vector.broadcast %36 : vector<1x256xf32> to vector<2x256xf32>
    %243 = arith.addf %242, %238 : vector<2x256xf32>
    %244 = arith.addf %243, %241 : vector<2x256xf32>
    %245 = math.tanh %244 : vector<2x256xf32>
    %cst_41 = arith.constant 5.000000e-01 : f32
    %246 = vector.broadcast %cst_41 : f32 to vector<2x256xf32>
    %247 = arith.mulf %246, %245 : vector<2x256xf32>
    %cst_42 = arith.constant 5.000000e-01 : f32
    %248 = vector.broadcast %cst_42 : f32 to vector<2x256xf32>
    %249 = arith.addf %247, %248 : vector<2x256xf32>
    %250 = vector.extract_strided_slice %249 {offsets = [0, 0], sizes = [2, 64], strides = [1, 1]} : vector<2x256xf32> to vector<2x64xf32>
    %251 = vector.extract_strided_slice %249 {offsets = [0, 64], sizes = [2, 64], strides = [1, 1]} : vector<2x256xf32> to vector<2x64xf32>
    %252 = vector.extract_strided_slice %245 {offsets = [0, 128], sizes = [2, 64], strides = [1, 1]} : vector<2x256xf32> to vector<2x64xf32>
    %253 = vector.extract_strided_slice %249 {offsets = [0, 192], sizes = [2, 64], strides = [1, 1]} : vector<2x256xf32> to vector<2x64xf32>
    %254 = arith.mulf %251, %147 : vector<2x64xf32>
    %255 = arith.mulf %250, %252 : vector<2x64xf32>
    %256 = arith.addf %254, %255 : vector<2x64xf32>
    %257 = math.tanh %256 : vector<2x64xf32>
    %258 = arith.mulf %253, %257 : vector<2x64xf32>
    %259 = vector.broadcast %28 : vector<1x64xf32> to vector<2x64xf32>
    %260 = arith.mulf %258, %259 : vector<2x64xf32>
    %cst_43 = arith.constant dense<0.000000e+00> : vector<2xf32>
    %261 = vector.multi_reduction <add>, %260, %cst_43 [1] : vector<2x64xf32> to vector<2xf32>
    %262 = vector.shape_cast %261 : vector<2xf32> to vector<2x1xf32>
    %263 = vector.extract_strided_slice %0 {offsets = [0, 2], sizes = [2, 1], strides = [1, 1]} : vector<2x8xf32> to vector<2x1xf32>
    %264 = vector.broadcast %263 : vector<2x1xf32> to vector<2x256xf32>
    %265 = vector.broadcast %6 : vector<1x256xf32> to vector<2x256xf32>
    %266 = arith.mulf %264, %265 : vector<2x256xf32>
    %267 = vector.broadcast %181 : vector<2x1xf32> to vector<2x256xf32>
    %268 = vector.broadcast %14 : vector<1x256xf32> to vector<2x256xf32>
    %269 = arith.mulf %267, %268 : vector<2x256xf32>
    %270 = vector.broadcast %30 : vector<1x256xf32> to vector<2x256xf32>
    %271 = arith.addf %270, %266 : vector<2x256xf32>
    %272 = arith.addf %271, %269 : vector<2x256xf32>
    %273 = math.tanh %272 : vector<2x256xf32>
    %cst_44 = arith.constant 5.000000e-01 : f32
    %274 = vector.broadcast %cst_44 : f32 to vector<2x256xf32>
    %275 = arith.mulf %274, %273 : vector<2x256xf32>
    %cst_45 = arith.constant 5.000000e-01 : f32
    %276 = vector.broadcast %cst_45 : f32 to vector<2x256xf32>
    %277 = arith.addf %275, %276 : vector<2x256xf32>
    %278 = vector.extract_strided_slice %277 {offsets = [0, 0], sizes = [2, 64], strides = [1, 1]} : vector<2x256xf32> to vector<2x64xf32>
    %279 = vector.extract_strided_slice %277 {offsets = [0, 64], sizes = [2, 64], strides = [1, 1]} : vector<2x256xf32> to vector<2x64xf32>
    %280 = vector.extract_strided_slice %273 {offsets = [0, 128], sizes = [2, 64], strides = [1, 1]} : vector<2x256xf32> to vector<2x64xf32>
    %281 = vector.extract_strided_slice %277 {offsets = [0, 192], sizes = [2, 64], strides = [1, 1]} : vector<2x256xf32> to vector<2x64xf32>
    %282 = arith.mulf %279, %175 : vector<2x64xf32>
    %283 = arith.mulf %278, %280 : vector<2x64xf32>
    %284 = arith.addf %282, %283 : vector<2x64xf32>
    %285 = math.tanh %284 : vector<2x64xf32>
    %286 = arith.mulf %281, %285 : vector<2x64xf32>
    %287 = vector.broadcast %22 : vector<1x64xf32> to vector<2x64xf32>
    %288 = arith.mulf %286, %287 : vector<2x64xf32>
    %cst_46 = arith.constant dense<0.000000e+00> : vector<2xf32>
    %289 = vector.multi_reduction <add>, %288, %cst_46 [1] : vector<2x64xf32> to vector<2xf32>
    %290 = vector.shape_cast %289 : vector<2xf32> to vector<2x1xf32>
    %291 = vector.broadcast %290 : vector<2x1xf32> to vector<2x256xf32>
    %292 = vector.broadcast %8 : vector<1x256xf32> to vector<2x256xf32>
    %293 = arith.mulf %291, %292 : vector<2x256xf32>
    %294 = vector.broadcast %208 : vector<2x1xf32> to vector<2x256xf32>
    %295 = vector.broadcast %16 : vector<1x256xf32> to vector<2x256xf32>
    %296 = arith.mulf %294, %295 : vector<2x256xf32>
    %297 = vector.broadcast %32 : vector<1x256xf32> to vector<2x256xf32>
    %298 = arith.addf %297, %293 : vector<2x256xf32>
    %299 = arith.addf %298, %296 : vector<2x256xf32>
    %300 = math.tanh %299 : vector<2x256xf32>
    %cst_47 = arith.constant 5.000000e-01 : f32
    %301 = vector.broadcast %cst_47 : f32 to vector<2x256xf32>
    %302 = arith.mulf %301, %300 : vector<2x256xf32>
    %cst_48 = arith.constant 5.000000e-01 : f32
    %303 = vector.broadcast %cst_48 : f32 to vector<2x256xf32>
    %304 = arith.addf %302, %303 : vector<2x256xf32>
    %305 = vector.extract_strided_slice %304 {offsets = [0, 0], sizes = [2, 64], strides = [1, 1]} : vector<2x256xf32> to vector<2x64xf32>
    %306 = vector.extract_strided_slice %304 {offsets = [0, 64], sizes = [2, 64], strides = [1, 1]} : vector<2x256xf32> to vector<2x64xf32>
    %307 = vector.extract_strided_slice %300 {offsets = [0, 128], sizes = [2, 64], strides = [1, 1]} : vector<2x256xf32> to vector<2x64xf32>
    %308 = vector.extract_strided_slice %304 {offsets = [0, 192], sizes = [2, 64], strides = [1, 1]} : vector<2x256xf32> to vector<2x64xf32>
    %309 = arith.mulf %306, %202 : vector<2x64xf32>
    %310 = arith.mulf %305, %307 : vector<2x64xf32>
    %311 = arith.addf %309, %310 : vector<2x64xf32>
    %312 = math.tanh %311 : vector<2x64xf32>
    %313 = arith.mulf %308, %312 : vector<2x64xf32>
    %314 = vector.broadcast %24 : vector<1x64xf32> to vector<2x64xf32>
    %315 = arith.mulf %313, %314 : vector<2x64xf32>
    %cst_49 = arith.constant dense<0.000000e+00> : vector<2xf32>
    %316 = vector.multi_reduction <add>, %315, %cst_49 [1] : vector<2x64xf32> to vector<2xf32>
    %317 = vector.shape_cast %316 : vector<2xf32> to vector<2x1xf32>
    %318 = vector.broadcast %317 : vector<2x1xf32> to vector<2x256xf32>
    %319 = vector.broadcast %10 : vector<1x256xf32> to vector<2x256xf32>
    %320 = arith.mulf %318, %319 : vector<2x256xf32>
    %321 = vector.broadcast %235 : vector<2x1xf32> to vector<2x256xf32>
    %322 = vector.broadcast %18 : vector<1x256xf32> to vector<2x256xf32>
    %323 = arith.mulf %321, %322 : vector<2x256xf32>
    %324 = vector.broadcast %34 : vector<1x256xf32> to vector<2x256xf32>
    %325 = arith.addf %324, %320 : vector<2x256xf32>
    %326 = arith.addf %325, %323 : vector<2x256xf32>
    %327 = math.tanh %326 : vector<2x256xf32>
    %cst_50 = arith.constant 5.000000e-01 : f32
    %328 = vector.broadcast %cst_50 : f32 to vector<2x256xf32>
    %329 = arith.mulf %328, %327 : vector<2x256xf32>
    %cst_51 = arith.constant 5.000000e-01 : f32
    %330 = vector.broadcast %cst_51 : f32 to vector<2x256xf32>
    %331 = arith.addf %329, %330 : vector<2x256xf32>
    %332 = vector.extract_strided_slice %331 {offsets = [0, 0], sizes = [2, 64], strides = [1, 1]} : vector<2x256xf32> to vector<2x64xf32>
    %333 = vector.extract_strided_slice %331 {offsets = [0, 64], sizes = [2, 64], strides = [1, 1]} : vector<2x256xf32> to vector<2x64xf32>
    %334 = vector.extract_strided_slice %327 {offsets = [0, 128], sizes = [2, 64], strides = [1, 1]} : vector<2x256xf32> to vector<2x64xf32>
    %335 = vector.extract_strided_slice %331 {offsets = [0, 192], sizes = [2, 64], strides = [1, 1]} : vector<2x256xf32> to vector<2x64xf32>
    %336 = arith.mulf %333, %229 : vector<2x64xf32>
    %337 = arith.mulf %332, %334 : vector<2x64xf32>
    %338 = arith.addf %336, %337 : vector<2x64xf32>
    %339 = math.tanh %338 : vector<2x64xf32>
    %340 = arith.mulf %335, %339 : vector<2x64xf32>
    %341 = vector.broadcast %26 : vector<1x64xf32> to vector<2x64xf32>
    %342 = arith.mulf %340, %341 : vector<2x64xf32>
    %cst_52 = arith.constant dense<0.000000e+00> : vector<2xf32>
    %343 = vector.multi_reduction <add>, %342, %cst_52 [1] : vector<2x64xf32> to vector<2xf32>
    %344 = vector.shape_cast %343 : vector<2xf32> to vector<2x1xf32>
    %345 = vector.broadcast %344 : vector<2x1xf32> to vector<2x256xf32>
    %346 = vector.broadcast %12 : vector<1x256xf32> to vector<2x256xf32>
    %347 = arith.mulf %345, %346 : vector<2x256xf32>
    %348 = vector.broadcast %262 : vector<2x1xf32> to vector<2x256xf32>
    %349 = vector.broadcast %20 : vector<1x256xf32> to vector<2x256xf32>
    %350 = arith.mulf %348, %349 : vector<2x256xf32>
    %351 = vector.broadcast %36 : vector<1x256xf32> to vector<2x256xf32>
    %352 = arith.addf %351, %347 : vector<2x256xf32>
    %353 = arith.addf %352, %350 : vector<2x256xf32>
    %354 = math.tanh %353 : vector<2x256xf32>
    %cst_53 = arith.constant 5.000000e-01 : f32
    %355 = vector.broadcast %cst_53 : f32 to vector<2x256xf32>
    %356 = arith.mulf %355, %354 : vector<2x256xf32>
    %cst_54 = arith.constant 5.000000e-01 : f32
    %357 = vector.broadcast %cst_54 : f32 to vector<2x256xf32>
    %358 = arith.addf %356, %357 : vector<2x256xf32>
    %359 = vector.extract_strided_slice %358 {offsets = [0, 0], sizes = [2, 64], strides = [1, 1]} : vector<2x256xf32> to vector<2x64xf32>
    %360 = vector.extract_strided_slice %358 {offsets = [0, 64], sizes = [2, 64], strides = [1, 1]} : vector<2x256xf32> to vector<2x64xf32>
    %361 = vector.extract_strided_slice %354 {offsets = [0, 128], sizes = [2, 64], strides = [1, 1]} : vector<2x256xf32> to vector<2x64xf32>
    %362 = vector.extract_strided_slice %358 {offsets = [0, 192], sizes = [2, 64], strides = [1, 1]} : vector<2x256xf32> to vector<2x64xf32>
    %363 = arith.mulf %360, %256 : vector<2x64xf32>
    %364 = arith.mulf %359, %361 : vector<2x64xf32>
    %365 = arith.addf %363, %364 : vector<2x64xf32>
    %366 = math.tanh %365 : vector<2x64xf32>
    %367 = arith.mulf %362, %366 : vector<2x64xf32>
    %368 = vector.broadcast %28 : vector<1x64xf32> to vector<2x64xf32>
    %369 = arith.mulf %367, %368 : vector<2x64xf32>
    %cst_55 = arith.constant dense<0.000000e+00> : vector<2xf32>
    %370 = vector.multi_reduction <add>, %369, %cst_55 [1] : vector<2x64xf32> to vector<2xf32>
    %371 = vector.shape_cast %370 : vector<2xf32> to vector<2x1xf32>
    %372 = vector.extract_strided_slice %0 {offsets = [0, 3], sizes = [2, 1], strides = [1, 1]} : vector<2x8xf32> to vector<2x1xf32>
    %373 = vector.broadcast %372 : vector<2x1xf32> to vector<2x256xf32>
    %374 = vector.broadcast %6 : vector<1x256xf32> to vector<2x256xf32>
    %375 = arith.mulf %373, %374 : vector<2x256xf32>
    %376 = vector.broadcast %290 : vector<2x1xf32> to vector<2x256xf32>
    %377 = vector.broadcast %14 : vector<1x256xf32> to vector<2x256xf32>
    %378 = arith.mulf %376, %377 : vector<2x256xf32>
    %379 = vector.broadcast %30 : vector<1x256xf32> to vector<2x256xf32>
    %380 = arith.addf %379, %375 : vector<2x256xf32>
    %381 = arith.addf %380, %378 : vector<2x256xf32>
    %382 = math.tanh %381 : vector<2x256xf32>
    %cst_56 = arith.constant 5.000000e-01 : f32
    %383 = vector.broadcast %cst_56 : f32 to vector<2x256xf32>
    %384 = arith.mulf %383, %382 : vector<2x256xf32>
    %cst_57 = arith.constant 5.000000e-01 : f32
    %385 = vector.broadcast %cst_57 : f32 to vector<2x256xf32>
    %386 = arith.addf %384, %385 : vector<2x256xf32>
    %387 = vector.extract_strided_slice %386 {offsets = [0, 0], sizes = [2, 64], strides = [1, 1]} : vector<2x256xf32> to vector<2x64xf32>
    %388 = vector.extract_strided_slice %386 {offsets = [0, 64], sizes = [2, 64], strides = [1, 1]} : vector<2x256xf32> to vector<2x64xf32>
    %389 = vector.extract_strided_slice %382 {offsets = [0, 128], sizes = [2, 64], strides = [1, 1]} : vector<2x256xf32> to vector<2x64xf32>
    %390 = vector.extract_strided_slice %386 {offsets = [0, 192], sizes = [2, 64], strides = [1, 1]} : vector<2x256xf32> to vector<2x64xf32>
    %391 = arith.mulf %388, %284 : vector<2x64xf32>
    %392 = arith.mulf %387, %389 : vector<2x64xf32>
    %393 = arith.addf %391, %392 : vector<2x64xf32>
    %394 = math.tanh %393 : vector<2x64xf32>
    %395 = arith.mulf %390, %394 : vector<2x64xf32>
    %396 = vector.broadcast %22 : vector<1x64xf32> to vector<2x64xf32>
    %397 = arith.mulf %395, %396 : vector<2x64xf32>
    %cst_58 = arith.constant dense<0.000000e+00> : vector<2xf32>
    %398 = vector.multi_reduction <add>, %397, %cst_58 [1] : vector<2x64xf32> to vector<2xf32>
    %399 = vector.shape_cast %398 : vector<2xf32> to vector<2x1xf32>
    %400 = vector.broadcast %399 : vector<2x1xf32> to vector<2x256xf32>
    %401 = vector.broadcast %8 : vector<1x256xf32> to vector<2x256xf32>
    %402 = arith.mulf %400, %401 : vector<2x256xf32>
    %403 = vector.broadcast %317 : vector<2x1xf32> to vector<2x256xf32>
    %404 = vector.broadcast %16 : vector<1x256xf32> to vector<2x256xf32>
    %405 = arith.mulf %403, %404 : vector<2x256xf32>
    %406 = vector.broadcast %32 : vector<1x256xf32> to vector<2x256xf32>
    %407 = arith.addf %406, %402 : vector<2x256xf32>
    %408 = arith.addf %407, %405 : vector<2x256xf32>
    %409 = math.tanh %408 : vector<2x256xf32>
    %cst_59 = arith.constant 5.000000e-01 : f32
    %410 = vector.broadcast %cst_59 : f32 to vector<2x256xf32>
    %411 = arith.mulf %410, %409 : vector<2x256xf32>
    %cst_60 = arith.constant 5.000000e-01 : f32
    %412 = vector.broadcast %cst_60 : f32 to vector<2x256xf32>
    %413 = arith.addf %411, %412 : vector<2x256xf32>
    %414 = vector.extract_strided_slice %413 {offsets = [0, 0], sizes = [2, 64], strides = [1, 1]} : vector<2x256xf32> to vector<2x64xf32>
    %415 = vector.extract_strided_slice %413 {offsets = [0, 64], sizes = [2, 64], strides = [1, 1]} : vector<2x256xf32> to vector<2x64xf32>
    %416 = vector.extract_strided_slice %409 {offsets = [0, 128], sizes = [2, 64], strides = [1, 1]} : vector<2x256xf32> to vector<2x64xf32>
    %417 = vector.extract_strided_slice %413 {offsets = [0, 192], sizes = [2, 64], strides = [1, 1]} : vector<2x256xf32> to vector<2x64xf32>
    %418 = arith.mulf %415, %311 : vector<2x64xf32>
    %419 = arith.mulf %414, %416 : vector<2x64xf32>
    %420 = arith.addf %418, %419 : vector<2x64xf32>
    %421 = math.tanh %420 : vector<2x64xf32>
    %422 = arith.mulf %417, %421 : vector<2x64xf32>
    %423 = vector.broadcast %24 : vector<1x64xf32> to vector<2x64xf32>
    %424 = arith.mulf %422, %423 : vector<2x64xf32>
    %cst_61 = arith.constant dense<0.000000e+00> : vector<2xf32>
    %425 = vector.multi_reduction <add>, %424, %cst_61 [1] : vector<2x64xf32> to vector<2xf32>
    %426 = vector.shape_cast %425 : vector<2xf32> to vector<2x1xf32>
    %427 = vector.broadcast %426 : vector<2x1xf32> to vector<2x256xf32>
    %428 = vector.broadcast %10 : vector<1x256xf32> to vector<2x256xf32>
    %429 = arith.mulf %427, %428 : vector<2x256xf32>
    %430 = vector.broadcast %344 : vector<2x1xf32> to vector<2x256xf32>
    %431 = vector.broadcast %18 : vector<1x256xf32> to vector<2x256xf32>
    %432 = arith.mulf %430, %431 : vector<2x256xf32>
    %433 = vector.broadcast %34 : vector<1x256xf32> to vector<2x256xf32>
    %434 = arith.addf %433, %429 : vector<2x256xf32>
    %435 = arith.addf %434, %432 : vector<2x256xf32>
    %436 = math.tanh %435 : vector<2x256xf32>
    %cst_62 = arith.constant 5.000000e-01 : f32
    %437 = vector.broadcast %cst_62 : f32 to vector<2x256xf32>
    %438 = arith.mulf %437, %436 : vector<2x256xf32>
    %cst_63 = arith.constant 5.000000e-01 : f32
    %439 = vector.broadcast %cst_63 : f32 to vector<2x256xf32>
    %440 = arith.addf %438, %439 : vector<2x256xf32>
    %441 = vector.extract_strided_slice %440 {offsets = [0, 0], sizes = [2, 64], strides = [1, 1]} : vector<2x256xf32> to vector<2x64xf32>
    %442 = vector.extract_strided_slice %440 {offsets = [0, 64], sizes = [2, 64], strides = [1, 1]} : vector<2x256xf32> to vector<2x64xf32>
    %443 = vector.extract_strided_slice %436 {offsets = [0, 128], sizes = [2, 64], strides = [1, 1]} : vector<2x256xf32> to vector<2x64xf32>
    %444 = vector.extract_strided_slice %440 {offsets = [0, 192], sizes = [2, 64], strides = [1, 1]} : vector<2x256xf32> to vector<2x64xf32>
    %445 = arith.mulf %442, %338 : vector<2x64xf32>
    %446 = arith.mulf %441, %443 : vector<2x64xf32>
    %447 = arith.addf %445, %446 : vector<2x64xf32>
    %448 = math.tanh %447 : vector<2x64xf32>
    %449 = arith.mulf %444, %448 : vector<2x64xf32>
    %450 = vector.broadcast %26 : vector<1x64xf32> to vector<2x64xf32>
    %451 = arith.mulf %449, %450 : vector<2x64xf32>
    %cst_64 = arith.constant dense<0.000000e+00> : vector<2xf32>
    %452 = vector.multi_reduction <add>, %451, %cst_64 [1] : vector<2x64xf32> to vector<2xf32>
    %453 = vector.shape_cast %452 : vector<2xf32> to vector<2x1xf32>
    %454 = vector.broadcast %453 : vector<2x1xf32> to vector<2x256xf32>
    %455 = vector.broadcast %12 : vector<1x256xf32> to vector<2x256xf32>
    %456 = arith.mulf %454, %455 : vector<2x256xf32>
    %457 = vector.broadcast %371 : vector<2x1xf32> to vector<2x256xf32>
    %458 = vector.broadcast %20 : vector<1x256xf32> to vector<2x256xf32>
    %459 = arith.mulf %457, %458 : vector<2x256xf32>
    %460 = vector.broadcast %36 : vector<1x256xf32> to vector<2x256xf32>
    %461 = arith.addf %460, %456 : vector<2x256xf32>
    %462 = arith.addf %461, %459 : vector<2x256xf32>
    %463 = math.tanh %462 : vector<2x256xf32>
    %cst_65 = arith.constant 5.000000e-01 : f32
    %464 = vector.broadcast %cst_65 : f32 to vector<2x256xf32>
    %465 = arith.mulf %464, %463 : vector<2x256xf32>
    %cst_66 = arith.constant 5.000000e-01 : f32
    %466 = vector.broadcast %cst_66 : f32 to vector<2x256xf32>
    %467 = arith.addf %465, %466 : vector<2x256xf32>
    %468 = vector.extract_strided_slice %467 {offsets = [0, 0], sizes = [2, 64], strides = [1, 1]} : vector<2x256xf32> to vector<2x64xf32>
    %469 = vector.extract_strided_slice %467 {offsets = [0, 64], sizes = [2, 64], strides = [1, 1]} : vector<2x256xf32> to vector<2x64xf32>
    %470 = vector.extract_strided_slice %463 {offsets = [0, 128], sizes = [2, 64], strides = [1, 1]} : vector<2x256xf32> to vector<2x64xf32>
    %471 = vector.extract_strided_slice %467 {offsets = [0, 192], sizes = [2, 64], strides = [1, 1]} : vector<2x256xf32> to vector<2x64xf32>
    %472 = arith.mulf %469, %365 : vector<2x64xf32>
    %473 = arith.mulf %468, %470 : vector<2x64xf32>
    %474 = arith.addf %472, %473 : vector<2x64xf32>
    %475 = math.tanh %474 : vector<2x64xf32>
    %476 = arith.mulf %471, %475 : vector<2x64xf32>
    %477 = vector.broadcast %28 : vector<1x64xf32> to vector<2x64xf32>
    %478 = arith.mulf %476, %477 : vector<2x64xf32>
    %cst_67 = arith.constant dense<0.000000e+00> : vector<2xf32>
    %479 = vector.multi_reduction <add>, %478, %cst_67 [1] : vector<2x64xf32> to vector<2xf32>
    %480 = vector.shape_cast %479 : vector<2xf32> to vector<2x1xf32>
    %481 = vector.extract_strided_slice %0 {offsets = [0, 4], sizes = [2, 1], strides = [1, 1]} : vector<2x8xf32> to vector<2x1xf32>
    %482 = vector.broadcast %481 : vector<2x1xf32> to vector<2x256xf32>
    %483 = vector.broadcast %6 : vector<1x256xf32> to vector<2x256xf32>
    %484 = arith.mulf %482, %483 : vector<2x256xf32>
    %485 = vector.broadcast %399 : vector<2x1xf32> to vector<2x256xf32>
    %486 = vector.broadcast %14 : vector<1x256xf32> to vector<2x256xf32>
    %487 = arith.mulf %485, %486 : vector<2x256xf32>
    %488 = vector.broadcast %30 : vector<1x256xf32> to vector<2x256xf32>
    %489 = arith.addf %488, %484 : vector<2x256xf32>
    %490 = arith.addf %489, %487 : vector<2x256xf32>
    %491 = math.tanh %490 : vector<2x256xf32>
    %cst_68 = arith.constant 5.000000e-01 : f32
    %492 = vector.broadcast %cst_68 : f32 to vector<2x256xf32>
    %493 = arith.mulf %492, %491 : vector<2x256xf32>
    %cst_69 = arith.constant 5.000000e-01 : f32
    %494 = vector.broadcast %cst_69 : f32 to vector<2x256xf32>
    %495 = arith.addf %493, %494 : vector<2x256xf32>
    %496 = vector.extract_strided_slice %495 {offsets = [0, 0], sizes = [2, 64], strides = [1, 1]} : vector<2x256xf32> to vector<2x64xf32>
    %497 = vector.extract_strided_slice %495 {offsets = [0, 64], sizes = [2, 64], strides = [1, 1]} : vector<2x256xf32> to vector<2x64xf32>
    %498 = vector.extract_strided_slice %491 {offsets = [0, 128], sizes = [2, 64], strides = [1, 1]} : vector<2x256xf32> to vector<2x64xf32>
    %499 = vector.extract_strided_slice %495 {offsets = [0, 192], sizes = [2, 64], strides = [1, 1]} : vector<2x256xf32> to vector<2x64xf32>
    %500 = arith.mulf %497, %393 : vector<2x64xf32>
    %501 = arith.mulf %496, %498 : vector<2x64xf32>
    %502 = arith.addf %500, %501 : vector<2x64xf32>
    %503 = math.tanh %502 : vector<2x64xf32>
    %504 = arith.mulf %499, %503 : vector<2x64xf32>
    %505 = vector.broadcast %22 : vector<1x64xf32> to vector<2x64xf32>
    %506 = arith.mulf %504, %505 : vector<2x64xf32>
    %cst_70 = arith.constant dense<0.000000e+00> : vector<2xf32>
    %507 = vector.multi_reduction <add>, %506, %cst_70 [1] : vector<2x64xf32> to vector<2xf32>
    %508 = vector.shape_cast %507 : vector<2xf32> to vector<2x1xf32>
    %509 = vector.broadcast %508 : vector<2x1xf32> to vector<2x256xf32>
    %510 = vector.broadcast %8 : vector<1x256xf32> to vector<2x256xf32>
    %511 = arith.mulf %509, %510 : vector<2x256xf32>
    %512 = vector.broadcast %426 : vector<2x1xf32> to vector<2x256xf32>
    %513 = vector.broadcast %16 : vector<1x256xf32> to vector<2x256xf32>
    %514 = arith.mulf %512, %513 : vector<2x256xf32>
    %515 = vector.broadcast %32 : vector<1x256xf32> to vector<2x256xf32>
    %516 = arith.addf %515, %511 : vector<2x256xf32>
    %517 = arith.addf %516, %514 : vector<2x256xf32>
    %518 = math.tanh %517 : vector<2x256xf32>
    %cst_71 = arith.constant 5.000000e-01 : f32
    %519 = vector.broadcast %cst_71 : f32 to vector<2x256xf32>
    %520 = arith.mulf %519, %518 : vector<2x256xf32>
    %cst_72 = arith.constant 5.000000e-01 : f32
    %521 = vector.broadcast %cst_72 : f32 to vector<2x256xf32>
    %522 = arith.addf %520, %521 : vector<2x256xf32>
    %523 = vector.extract_strided_slice %522 {offsets = [0, 0], sizes = [2, 64], strides = [1, 1]} : vector<2x256xf32> to vector<2x64xf32>
    %524 = vector.extract_strided_slice %522 {offsets = [0, 64], sizes = [2, 64], strides = [1, 1]} : vector<2x256xf32> to vector<2x64xf32>
    %525 = vector.extract_strided_slice %518 {offsets = [0, 128], sizes = [2, 64], strides = [1, 1]} : vector<2x256xf32> to vector<2x64xf32>
    %526 = vector.extract_strided_slice %522 {offsets = [0, 192], sizes = [2, 64], strides = [1, 1]} : vector<2x256xf32> to vector<2x64xf32>
    %527 = arith.mulf %524, %420 : vector<2x64xf32>
    %528 = arith.mulf %523, %525 : vector<2x64xf32>
    %529 = arith.addf %527, %528 : vector<2x64xf32>
    %530 = math.tanh %529 : vector<2x64xf32>
    %531 = arith.mulf %526, %530 : vector<2x64xf32>
    %532 = vector.broadcast %24 : vector<1x64xf32> to vector<2x64xf32>
    %533 = arith.mulf %531, %532 : vector<2x64xf32>
    %cst_73 = arith.constant dense<0.000000e+00> : vector<2xf32>
    %534 = vector.multi_reduction <add>, %533, %cst_73 [1] : vector<2x64xf32> to vector<2xf32>
    %535 = vector.shape_cast %534 : vector<2xf32> to vector<2x1xf32>
    %536 = vector.broadcast %535 : vector<2x1xf32> to vector<2x256xf32>
    %537 = vector.broadcast %10 : vector<1x256xf32> to vector<2x256xf32>
    %538 = arith.mulf %536, %537 : vector<2x256xf32>
    %539 = vector.broadcast %453 : vector<2x1xf32> to vector<2x256xf32>
    %540 = vector.broadcast %18 : vector<1x256xf32> to vector<2x256xf32>
    %541 = arith.mulf %539, %540 : vector<2x256xf32>
    %542 = vector.broadcast %34 : vector<1x256xf32> to vector<2x256xf32>
    %543 = arith.addf %542, %538 : vector<2x256xf32>
    %544 = arith.addf %543, %541 : vector<2x256xf32>
    %545 = math.tanh %544 : vector<2x256xf32>
    %cst_74 = arith.constant 5.000000e-01 : f32
    %546 = vector.broadcast %cst_74 : f32 to vector<2x256xf32>
    %547 = arith.mulf %546, %545 : vector<2x256xf32>
    %cst_75 = arith.constant 5.000000e-01 : f32
    %548 = vector.broadcast %cst_75 : f32 to vector<2x256xf32>
    %549 = arith.addf %547, %548 : vector<2x256xf32>
    %550 = vector.extract_strided_slice %549 {offsets = [0, 0], sizes = [2, 64], strides = [1, 1]} : vector<2x256xf32> to vector<2x64xf32>
    %551 = vector.extract_strided_slice %549 {offsets = [0, 64], sizes = [2, 64], strides = [1, 1]} : vector<2x256xf32> to vector<2x64xf32>
    %552 = vector.extract_strided_slice %545 {offsets = [0, 128], sizes = [2, 64], strides = [1, 1]} : vector<2x256xf32> to vector<2x64xf32>
    %553 = vector.extract_strided_slice %549 {offsets = [0, 192], sizes = [2, 64], strides = [1, 1]} : vector<2x256xf32> to vector<2x64xf32>
    %554 = arith.mulf %551, %447 : vector<2x64xf32>
    %555 = arith.mulf %550, %552 : vector<2x64xf32>
    %556 = arith.addf %554, %555 : vector<2x64xf32>
    %557 = math.tanh %556 : vector<2x64xf32>
    %558 = arith.mulf %553, %557 : vector<2x64xf32>
    %559 = vector.broadcast %26 : vector<1x64xf32> to vector<2x64xf32>
    %560 = arith.mulf %558, %559 : vector<2x64xf32>
    %cst_76 = arith.constant dense<0.000000e+00> : vector<2xf32>
    %561 = vector.multi_reduction <add>, %560, %cst_76 [1] : vector<2x64xf32> to vector<2xf32>
    %562 = vector.shape_cast %561 : vector<2xf32> to vector<2x1xf32>
    %563 = vector.broadcast %562 : vector<2x1xf32> to vector<2x256xf32>
    %564 = vector.broadcast %12 : vector<1x256xf32> to vector<2x256xf32>
    %565 = arith.mulf %563, %564 : vector<2x256xf32>
    %566 = vector.broadcast %480 : vector<2x1xf32> to vector<2x256xf32>
    %567 = vector.broadcast %20 : vector<1x256xf32> to vector<2x256xf32>
    %568 = arith.mulf %566, %567 : vector<2x256xf32>
    %569 = vector.broadcast %36 : vector<1x256xf32> to vector<2x256xf32>
    %570 = arith.addf %569, %565 : vector<2x256xf32>
    %571 = arith.addf %570, %568 : vector<2x256xf32>
    %572 = math.tanh %571 : vector<2x256xf32>
    %cst_77 = arith.constant 5.000000e-01 : f32
    %573 = vector.broadcast %cst_77 : f32 to vector<2x256xf32>
    %574 = arith.mulf %573, %572 : vector<2x256xf32>
    %cst_78 = arith.constant 5.000000e-01 : f32
    %575 = vector.broadcast %cst_78 : f32 to vector<2x256xf32>
    %576 = arith.addf %574, %575 : vector<2x256xf32>
    %577 = vector.extract_strided_slice %576 {offsets = [0, 0], sizes = [2, 64], strides = [1, 1]} : vector<2x256xf32> to vector<2x64xf32>
    %578 = vector.extract_strided_slice %576 {offsets = [0, 64], sizes = [2, 64], strides = [1, 1]} : vector<2x256xf32> to vector<2x64xf32>
    %579 = vector.extract_strided_slice %572 {offsets = [0, 128], sizes = [2, 64], strides = [1, 1]} : vector<2x256xf32> to vector<2x64xf32>
    %580 = vector.extract_strided_slice %576 {offsets = [0, 192], sizes = [2, 64], strides = [1, 1]} : vector<2x256xf32> to vector<2x64xf32>
    %581 = arith.mulf %578, %474 : vector<2x64xf32>
    %582 = arith.mulf %577, %579 : vector<2x64xf32>
    %583 = arith.addf %581, %582 : vector<2x64xf32>
    %584 = math.tanh %583 : vector<2x64xf32>
    %585 = arith.mulf %580, %584 : vector<2x64xf32>
    %586 = vector.broadcast %28 : vector<1x64xf32> to vector<2x64xf32>
    %587 = arith.mulf %585, %586 : vector<2x64xf32>
    %cst_79 = arith.constant dense<0.000000e+00> : vector<2xf32>
    %588 = vector.multi_reduction <add>, %587, %cst_79 [1] : vector<2x64xf32> to vector<2xf32>
    %589 = vector.shape_cast %588 : vector<2xf32> to vector<2x1xf32>
    %590 = vector.extract_strided_slice %0 {offsets = [0, 5], sizes = [2, 1], strides = [1, 1]} : vector<2x8xf32> to vector<2x1xf32>
    %591 = vector.broadcast %590 : vector<2x1xf32> to vector<2x256xf32>
    %592 = vector.broadcast %6 : vector<1x256xf32> to vector<2x256xf32>
    %593 = arith.mulf %591, %592 : vector<2x256xf32>
    %594 = vector.broadcast %508 : vector<2x1xf32> to vector<2x256xf32>
    %595 = vector.broadcast %14 : vector<1x256xf32> to vector<2x256xf32>
    %596 = arith.mulf %594, %595 : vector<2x256xf32>
    %597 = vector.broadcast %30 : vector<1x256xf32> to vector<2x256xf32>
    %598 = arith.addf %597, %593 : vector<2x256xf32>
    %599 = arith.addf %598, %596 : vector<2x256xf32>
    %600 = math.tanh %599 : vector<2x256xf32>
    %cst_80 = arith.constant 5.000000e-01 : f32
    %601 = vector.broadcast %cst_80 : f32 to vector<2x256xf32>
    %602 = arith.mulf %601, %600 : vector<2x256xf32>
    %cst_81 = arith.constant 5.000000e-01 : f32
    %603 = vector.broadcast %cst_81 : f32 to vector<2x256xf32>
    %604 = arith.addf %602, %603 : vector<2x256xf32>
    %605 = vector.extract_strided_slice %604 {offsets = [0, 0], sizes = [2, 64], strides = [1, 1]} : vector<2x256xf32> to vector<2x64xf32>
    %606 = vector.extract_strided_slice %604 {offsets = [0, 64], sizes = [2, 64], strides = [1, 1]} : vector<2x256xf32> to vector<2x64xf32>
    %607 = vector.extract_strided_slice %600 {offsets = [0, 128], sizes = [2, 64], strides = [1, 1]} : vector<2x256xf32> to vector<2x64xf32>
    %608 = vector.extract_strided_slice %604 {offsets = [0, 192], sizes = [2, 64], strides = [1, 1]} : vector<2x256xf32> to vector<2x64xf32>
    %609 = arith.mulf %606, %502 : vector<2x64xf32>
    %610 = arith.mulf %605, %607 : vector<2x64xf32>
    %611 = arith.addf %609, %610 : vector<2x64xf32>
    %612 = math.tanh %611 : vector<2x64xf32>
    %613 = arith.mulf %608, %612 : vector<2x64xf32>
    %614 = vector.broadcast %22 : vector<1x64xf32> to vector<2x64xf32>
    %615 = arith.mulf %613, %614 : vector<2x64xf32>
    %cst_82 = arith.constant dense<0.000000e+00> : vector<2xf32>
    %616 = vector.multi_reduction <add>, %615, %cst_82 [1] : vector<2x64xf32> to vector<2xf32>
    %617 = vector.shape_cast %616 : vector<2xf32> to vector<2x1xf32>
    %618 = vector.broadcast %617 : vector<2x1xf32> to vector<2x256xf32>
    %619 = vector.broadcast %8 : vector<1x256xf32> to vector<2x256xf32>
    %620 = arith.mulf %618, %619 : vector<2x256xf32>
    %621 = vector.broadcast %535 : vector<2x1xf32> to vector<2x256xf32>
    %622 = vector.broadcast %16 : vector<1x256xf32> to vector<2x256xf32>
    %623 = arith.mulf %621, %622 : vector<2x256xf32>
    %624 = vector.broadcast %32 : vector<1x256xf32> to vector<2x256xf32>
    %625 = arith.addf %624, %620 : vector<2x256xf32>
    %626 = arith.addf %625, %623 : vector<2x256xf32>
    %627 = math.tanh %626 : vector<2x256xf32>
    %cst_83 = arith.constant 5.000000e-01 : f32
    %628 = vector.broadcast %cst_83 : f32 to vector<2x256xf32>
    %629 = arith.mulf %628, %627 : vector<2x256xf32>
    %cst_84 = arith.constant 5.000000e-01 : f32
    %630 = vector.broadcast %cst_84 : f32 to vector<2x256xf32>
    %631 = arith.addf %629, %630 : vector<2x256xf32>
    %632 = vector.extract_strided_slice %631 {offsets = [0, 0], sizes = [2, 64], strides = [1, 1]} : vector<2x256xf32> to vector<2x64xf32>
    %633 = vector.extract_strided_slice %631 {offsets = [0, 64], sizes = [2, 64], strides = [1, 1]} : vector<2x256xf32> to vector<2x64xf32>
    %634 = vector.extract_strided_slice %627 {offsets = [0, 128], sizes = [2, 64], strides = [1, 1]} : vector<2x256xf32> to vector<2x64xf32>
    %635 = vector.extract_strided_slice %631 {offsets = [0, 192], sizes = [2, 64], strides = [1, 1]} : vector<2x256xf32> to vector<2x64xf32>
    %636 = arith.mulf %633, %529 : vector<2x64xf32>
    %637 = arith.mulf %632, %634 : vector<2x64xf32>
    %638 = arith.addf %636, %637 : vector<2x64xf32>
    %639 = math.tanh %638 : vector<2x64xf32>
    %640 = arith.mulf %635, %639 : vector<2x64xf32>
    %641 = vector.broadcast %24 : vector<1x64xf32> to vector<2x64xf32>
    %642 = arith.mulf %640, %641 : vector<2x64xf32>
    %cst_85 = arith.constant dense<0.000000e+00> : vector<2xf32>
    %643 = vector.multi_reduction <add>, %642, %cst_85 [1] : vector<2x64xf32> to vector<2xf32>
    %644 = vector.shape_cast %643 : vector<2xf32> to vector<2x1xf32>
    %645 = vector.broadcast %644 : vector<2x1xf32> to vector<2x256xf32>
    %646 = vector.broadcast %10 : vector<1x256xf32> to vector<2x256xf32>
    %647 = arith.mulf %645, %646 : vector<2x256xf32>
    %648 = vector.broadcast %562 : vector<2x1xf32> to vector<2x256xf32>
    %649 = vector.broadcast %18 : vector<1x256xf32> to vector<2x256xf32>
    %650 = arith.mulf %648, %649 : vector<2x256xf32>
    %651 = vector.broadcast %34 : vector<1x256xf32> to vector<2x256xf32>
    %652 = arith.addf %651, %647 : vector<2x256xf32>
    %653 = arith.addf %652, %650 : vector<2x256xf32>
    %654 = math.tanh %653 : vector<2x256xf32>
    %cst_86 = arith.constant 5.000000e-01 : f32
    %655 = vector.broadcast %cst_86 : f32 to vector<2x256xf32>
    %656 = arith.mulf %655, %654 : vector<2x256xf32>
    %cst_87 = arith.constant 5.000000e-01 : f32
    %657 = vector.broadcast %cst_87 : f32 to vector<2x256xf32>
    %658 = arith.addf %656, %657 : vector<2x256xf32>
    %659 = vector.extract_strided_slice %658 {offsets = [0, 0], sizes = [2, 64], strides = [1, 1]} : vector<2x256xf32> to vector<2x64xf32>
    %660 = vector.extract_strided_slice %658 {offsets = [0, 64], sizes = [2, 64], strides = [1, 1]} : vector<2x256xf32> to vector<2x64xf32>
    %661 = vector.extract_strided_slice %654 {offsets = [0, 128], sizes = [2, 64], strides = [1, 1]} : vector<2x256xf32> to vector<2x64xf32>
    %662 = vector.extract_strided_slice %658 {offsets = [0, 192], sizes = [2, 64], strides = [1, 1]} : vector<2x256xf32> to vector<2x64xf32>
    %663 = arith.mulf %660, %556 : vector<2x64xf32>
    %664 = arith.mulf %659, %661 : vector<2x64xf32>
    %665 = arith.addf %663, %664 : vector<2x64xf32>
    %666 = math.tanh %665 : vector<2x64xf32>
    %667 = arith.mulf %662, %666 : vector<2x64xf32>
    %668 = vector.broadcast %26 : vector<1x64xf32> to vector<2x64xf32>
    %669 = arith.mulf %667, %668 : vector<2x64xf32>
    %cst_88 = arith.constant dense<0.000000e+00> : vector<2xf32>
    %670 = vector.multi_reduction <add>, %669, %cst_88 [1] : vector<2x64xf32> to vector<2xf32>
    %671 = vector.shape_cast %670 : vector<2xf32> to vector<2x1xf32>
    %672 = vector.broadcast %671 : vector<2x1xf32> to vector<2x256xf32>
    %673 = vector.broadcast %12 : vector<1x256xf32> to vector<2x256xf32>
    %674 = arith.mulf %672, %673 : vector<2x256xf32>
    %675 = vector.broadcast %589 : vector<2x1xf32> to vector<2x256xf32>
    %676 = vector.broadcast %20 : vector<1x256xf32> to vector<2x256xf32>
    %677 = arith.mulf %675, %676 : vector<2x256xf32>
    %678 = vector.broadcast %36 : vector<1x256xf32> to vector<2x256xf32>
    %679 = arith.addf %678, %674 : vector<2x256xf32>
    %680 = arith.addf %679, %677 : vector<2x256xf32>
    %681 = math.tanh %680 : vector<2x256xf32>
    %cst_89 = arith.constant 5.000000e-01 : f32
    %682 = vector.broadcast %cst_89 : f32 to vector<2x256xf32>
    %683 = arith.mulf %682, %681 : vector<2x256xf32>
    %cst_90 = arith.constant 5.000000e-01 : f32
    %684 = vector.broadcast %cst_90 : f32 to vector<2x256xf32>
    %685 = arith.addf %683, %684 : vector<2x256xf32>
    %686 = vector.extract_strided_slice %685 {offsets = [0, 0], sizes = [2, 64], strides = [1, 1]} : vector<2x256xf32> to vector<2x64xf32>
    %687 = vector.extract_strided_slice %685 {offsets = [0, 64], sizes = [2, 64], strides = [1, 1]} : vector<2x256xf32> to vector<2x64xf32>
    %688 = vector.extract_strided_slice %681 {offsets = [0, 128], sizes = [2, 64], strides = [1, 1]} : vector<2x256xf32> to vector<2x64xf32>
    %689 = vector.extract_strided_slice %685 {offsets = [0, 192], sizes = [2, 64], strides = [1, 1]} : vector<2x256xf32> to vector<2x64xf32>
    %690 = arith.mulf %687, %583 : vector<2x64xf32>
    %691 = arith.mulf %686, %688 : vector<2x64xf32>
    %692 = arith.addf %690, %691 : vector<2x64xf32>
    %693 = math.tanh %692 : vector<2x64xf32>
    %694 = arith.mulf %689, %693 : vector<2x64xf32>
    %695 = vector.broadcast %28 : vector<1x64xf32> to vector<2x64xf32>
    %696 = arith.mulf %694, %695 : vector<2x64xf32>
    %cst_91 = arith.constant dense<0.000000e+00> : vector<2xf32>
    %697 = vector.multi_reduction <add>, %696, %cst_91 [1] : vector<2x64xf32> to vector<2xf32>
    %698 = vector.shape_cast %697 : vector<2xf32> to vector<2x1xf32>
    %699 = vector.extract_strided_slice %0 {offsets = [0, 6], sizes = [2, 1], strides = [1, 1]} : vector<2x8xf32> to vector<2x1xf32>
    %700 = vector.broadcast %699 : vector<2x1xf32> to vector<2x256xf32>
    %701 = vector.broadcast %6 : vector<1x256xf32> to vector<2x256xf32>
    %702 = arith.mulf %700, %701 : vector<2x256xf32>
    %703 = vector.broadcast %617 : vector<2x1xf32> to vector<2x256xf32>
    %704 = vector.broadcast %14 : vector<1x256xf32> to vector<2x256xf32>
    %705 = arith.mulf %703, %704 : vector<2x256xf32>
    %706 = vector.broadcast %30 : vector<1x256xf32> to vector<2x256xf32>
    %707 = arith.addf %706, %702 : vector<2x256xf32>
    %708 = arith.addf %707, %705 : vector<2x256xf32>
    %709 = math.tanh %708 : vector<2x256xf32>
    %cst_92 = arith.constant 5.000000e-01 : f32
    %710 = vector.broadcast %cst_92 : f32 to vector<2x256xf32>
    %711 = arith.mulf %710, %709 : vector<2x256xf32>
    %cst_93 = arith.constant 5.000000e-01 : f32
    %712 = vector.broadcast %cst_93 : f32 to vector<2x256xf32>
    %713 = arith.addf %711, %712 : vector<2x256xf32>
    %714 = vector.extract_strided_slice %713 {offsets = [0, 0], sizes = [2, 64], strides = [1, 1]} : vector<2x256xf32> to vector<2x64xf32>
    %715 = vector.extract_strided_slice %713 {offsets = [0, 64], sizes = [2, 64], strides = [1, 1]} : vector<2x256xf32> to vector<2x64xf32>
    %716 = vector.extract_strided_slice %709 {offsets = [0, 128], sizes = [2, 64], strides = [1, 1]} : vector<2x256xf32> to vector<2x64xf32>
    %717 = vector.extract_strided_slice %713 {offsets = [0, 192], sizes = [2, 64], strides = [1, 1]} : vector<2x256xf32> to vector<2x64xf32>
    %718 = arith.mulf %715, %611 : vector<2x64xf32>
    %719 = arith.mulf %714, %716 : vector<2x64xf32>
    %720 = arith.addf %718, %719 : vector<2x64xf32>
    %721 = math.tanh %720 : vector<2x64xf32>
    %722 = arith.mulf %717, %721 : vector<2x64xf32>
    %723 = vector.broadcast %22 : vector<1x64xf32> to vector<2x64xf32>
    %724 = arith.mulf %722, %723 : vector<2x64xf32>
    %cst_94 = arith.constant dense<0.000000e+00> : vector<2xf32>
    %725 = vector.multi_reduction <add>, %724, %cst_94 [1] : vector<2x64xf32> to vector<2xf32>
    %726 = vector.shape_cast %725 : vector<2xf32> to vector<2x1xf32>
    %727 = vector.broadcast %726 : vector<2x1xf32> to vector<2x256xf32>
    %728 = vector.broadcast %8 : vector<1x256xf32> to vector<2x256xf32>
    %729 = arith.mulf %727, %728 : vector<2x256xf32>
    %730 = vector.broadcast %644 : vector<2x1xf32> to vector<2x256xf32>
    %731 = vector.broadcast %16 : vector<1x256xf32> to vector<2x256xf32>
    %732 = arith.mulf %730, %731 : vector<2x256xf32>
    %733 = vector.broadcast %32 : vector<1x256xf32> to vector<2x256xf32>
    %734 = arith.addf %733, %729 : vector<2x256xf32>
    %735 = arith.addf %734, %732 : vector<2x256xf32>
    %736 = math.tanh %735 : vector<2x256xf32>
    %cst_95 = arith.constant 5.000000e-01 : f32
    %737 = vector.broadcast %cst_95 : f32 to vector<2x256xf32>
    %738 = arith.mulf %737, %736 : vector<2x256xf32>
    %cst_96 = arith.constant 5.000000e-01 : f32
    %739 = vector.broadcast %cst_96 : f32 to vector<2x256xf32>
    %740 = arith.addf %738, %739 : vector<2x256xf32>
    %741 = vector.extract_strided_slice %740 {offsets = [0, 0], sizes = [2, 64], strides = [1, 1]} : vector<2x256xf32> to vector<2x64xf32>
    %742 = vector.extract_strided_slice %740 {offsets = [0, 64], sizes = [2, 64], strides = [1, 1]} : vector<2x256xf32> to vector<2x64xf32>
    %743 = vector.extract_strided_slice %736 {offsets = [0, 128], sizes = [2, 64], strides = [1, 1]} : vector<2x256xf32> to vector<2x64xf32>
    %744 = vector.extract_strided_slice %740 {offsets = [0, 192], sizes = [2, 64], strides = [1, 1]} : vector<2x256xf32> to vector<2x64xf32>
    %745 = arith.mulf %742, %638 : vector<2x64xf32>
    %746 = arith.mulf %741, %743 : vector<2x64xf32>
    %747 = arith.addf %745, %746 : vector<2x64xf32>
    %748 = math.tanh %747 : vector<2x64xf32>
    %749 = arith.mulf %744, %748 : vector<2x64xf32>
    %750 = vector.broadcast %24 : vector<1x64xf32> to vector<2x64xf32>
    %751 = arith.mulf %749, %750 : vector<2x64xf32>
    %cst_97 = arith.constant dense<0.000000e+00> : vector<2xf32>
    %752 = vector.multi_reduction <add>, %751, %cst_97 [1] : vector<2x64xf32> to vector<2xf32>
    %753 = vector.shape_cast %752 : vector<2xf32> to vector<2x1xf32>
    %754 = vector.broadcast %753 : vector<2x1xf32> to vector<2x256xf32>
    %755 = vector.broadcast %10 : vector<1x256xf32> to vector<2x256xf32>
    %756 = arith.mulf %754, %755 : vector<2x256xf32>
    %757 = vector.broadcast %671 : vector<2x1xf32> to vector<2x256xf32>
    %758 = vector.broadcast %18 : vector<1x256xf32> to vector<2x256xf32>
    %759 = arith.mulf %757, %758 : vector<2x256xf32>
    %760 = vector.broadcast %34 : vector<1x256xf32> to vector<2x256xf32>
    %761 = arith.addf %760, %756 : vector<2x256xf32>
    %762 = arith.addf %761, %759 : vector<2x256xf32>
    %763 = math.tanh %762 : vector<2x256xf32>
    %cst_98 = arith.constant 5.000000e-01 : f32
    %764 = vector.broadcast %cst_98 : f32 to vector<2x256xf32>
    %765 = arith.mulf %764, %763 : vector<2x256xf32>
    %cst_99 = arith.constant 5.000000e-01 : f32
    %766 = vector.broadcast %cst_99 : f32 to vector<2x256xf32>
    %767 = arith.addf %765, %766 : vector<2x256xf32>
    %768 = vector.extract_strided_slice %767 {offsets = [0, 0], sizes = [2, 64], strides = [1, 1]} : vector<2x256xf32> to vector<2x64xf32>
    %769 = vector.extract_strided_slice %767 {offsets = [0, 64], sizes = [2, 64], strides = [1, 1]} : vector<2x256xf32> to vector<2x64xf32>
    %770 = vector.extract_strided_slice %763 {offsets = [0, 128], sizes = [2, 64], strides = [1, 1]} : vector<2x256xf32> to vector<2x64xf32>
    %771 = vector.extract_strided_slice %767 {offsets = [0, 192], sizes = [2, 64], strides = [1, 1]} : vector<2x256xf32> to vector<2x64xf32>
    %772 = arith.mulf %769, %665 : vector<2x64xf32>
    %773 = arith.mulf %768, %770 : vector<2x64xf32>
    %774 = arith.addf %772, %773 : vector<2x64xf32>
    %775 = math.tanh %774 : vector<2x64xf32>
    %776 = arith.mulf %771, %775 : vector<2x64xf32>
    %777 = vector.broadcast %26 : vector<1x64xf32> to vector<2x64xf32>
    %778 = arith.mulf %776, %777 : vector<2x64xf32>
    %cst_100 = arith.constant dense<0.000000e+00> : vector<2xf32>
    %779 = vector.multi_reduction <add>, %778, %cst_100 [1] : vector<2x64xf32> to vector<2xf32>
    %780 = vector.shape_cast %779 : vector<2xf32> to vector<2x1xf32>
    %781 = vector.broadcast %780 : vector<2x1xf32> to vector<2x256xf32>
    %782 = vector.broadcast %12 : vector<1x256xf32> to vector<2x256xf32>
    %783 = arith.mulf %781, %782 : vector<2x256xf32>
    %784 = vector.broadcast %698 : vector<2x1xf32> to vector<2x256xf32>
    %785 = vector.broadcast %20 : vector<1x256xf32> to vector<2x256xf32>
    %786 = arith.mulf %784, %785 : vector<2x256xf32>
    %787 = vector.broadcast %36 : vector<1x256xf32> to vector<2x256xf32>
    %788 = arith.addf %787, %783 : vector<2x256xf32>
    %789 = arith.addf %788, %786 : vector<2x256xf32>
    %790 = math.tanh %789 : vector<2x256xf32>
    %cst_101 = arith.constant 5.000000e-01 : f32
    %791 = vector.broadcast %cst_101 : f32 to vector<2x256xf32>
    %792 = arith.mulf %791, %790 : vector<2x256xf32>
    %cst_102 = arith.constant 5.000000e-01 : f32
    %793 = vector.broadcast %cst_102 : f32 to vector<2x256xf32>
    %794 = arith.addf %792, %793 : vector<2x256xf32>
    %795 = vector.extract_strided_slice %794 {offsets = [0, 0], sizes = [2, 64], strides = [1, 1]} : vector<2x256xf32> to vector<2x64xf32>
    %796 = vector.extract_strided_slice %794 {offsets = [0, 64], sizes = [2, 64], strides = [1, 1]} : vector<2x256xf32> to vector<2x64xf32>
    %797 = vector.extract_strided_slice %790 {offsets = [0, 128], sizes = [2, 64], strides = [1, 1]} : vector<2x256xf32> to vector<2x64xf32>
    %798 = vector.extract_strided_slice %794 {offsets = [0, 192], sizes = [2, 64], strides = [1, 1]} : vector<2x256xf32> to vector<2x64xf32>
    %799 = arith.mulf %796, %692 : vector<2x64xf32>
    %800 = arith.mulf %795, %797 : vector<2x64xf32>
    %801 = arith.addf %799, %800 : vector<2x64xf32>
    %802 = math.tanh %801 : vector<2x64xf32>
    %803 = arith.mulf %798, %802 : vector<2x64xf32>
    %804 = vector.broadcast %28 : vector<1x64xf32> to vector<2x64xf32>
    %805 = arith.mulf %803, %804 : vector<2x64xf32>
    %cst_103 = arith.constant dense<0.000000e+00> : vector<2xf32>
    %806 = vector.multi_reduction <add>, %805, %cst_103 [1] : vector<2x64xf32> to vector<2xf32>
    %807 = vector.shape_cast %806 : vector<2xf32> to vector<2x1xf32>
    %808 = vector.extract_strided_slice %0 {offsets = [0, 7], sizes = [2, 1], strides = [1, 1]} : vector<2x8xf32> to vector<2x1xf32>
    %809 = vector.broadcast %808 : vector<2x1xf32> to vector<2x256xf32>
    %810 = vector.broadcast %6 : vector<1x256xf32> to vector<2x256xf32>
    %811 = arith.mulf %809, %810 : vector<2x256xf32>
    %812 = vector.broadcast %726 : vector<2x1xf32> to vector<2x256xf32>
    %813 = vector.broadcast %14 : vector<1x256xf32> to vector<2x256xf32>
    %814 = arith.mulf %812, %813 : vector<2x256xf32>
    %815 = vector.broadcast %30 : vector<1x256xf32> to vector<2x256xf32>
    %816 = arith.addf %815, %811 : vector<2x256xf32>
    %817 = arith.addf %816, %814 : vector<2x256xf32>
    %818 = math.tanh %817 : vector<2x256xf32>
    %cst_104 = arith.constant 5.000000e-01 : f32
    %819 = vector.broadcast %cst_104 : f32 to vector<2x256xf32>
    %820 = arith.mulf %819, %818 : vector<2x256xf32>
    %cst_105 = arith.constant 5.000000e-01 : f32
    %821 = vector.broadcast %cst_105 : f32 to vector<2x256xf32>
    %822 = arith.addf %820, %821 : vector<2x256xf32>
    %823 = vector.extract_strided_slice %822 {offsets = [0, 0], sizes = [2, 64], strides = [1, 1]} : vector<2x256xf32> to vector<2x64xf32>
    %824 = vector.extract_strided_slice %822 {offsets = [0, 64], sizes = [2, 64], strides = [1, 1]} : vector<2x256xf32> to vector<2x64xf32>
    %825 = vector.extract_strided_slice %818 {offsets = [0, 128], sizes = [2, 64], strides = [1, 1]} : vector<2x256xf32> to vector<2x64xf32>
    %826 = vector.extract_strided_slice %822 {offsets = [0, 192], sizes = [2, 64], strides = [1, 1]} : vector<2x256xf32> to vector<2x64xf32>
    %827 = arith.mulf %824, %720 : vector<2x64xf32>
    %828 = arith.mulf %823, %825 : vector<2x64xf32>
    %829 = arith.addf %827, %828 : vector<2x64xf32>
    %830 = math.tanh %829 : vector<2x64xf32>
    %831 = arith.mulf %826, %830 : vector<2x64xf32>
    %832 = vector.broadcast %22 : vector<1x64xf32> to vector<2x64xf32>
    %833 = arith.mulf %831, %832 : vector<2x64xf32>
    %cst_106 = arith.constant dense<0.000000e+00> : vector<2xf32>
    %834 = vector.multi_reduction <add>, %833, %cst_106 [1] : vector<2x64xf32> to vector<2xf32>
    %835 = vector.shape_cast %834 : vector<2xf32> to vector<2x1xf32>
    %836 = vector.broadcast %835 : vector<2x1xf32> to vector<2x256xf32>
    %837 = vector.broadcast %8 : vector<1x256xf32> to vector<2x256xf32>
    %838 = arith.mulf %836, %837 : vector<2x256xf32>
    %839 = vector.broadcast %753 : vector<2x1xf32> to vector<2x256xf32>
    %840 = vector.broadcast %16 : vector<1x256xf32> to vector<2x256xf32>
    %841 = arith.mulf %839, %840 : vector<2x256xf32>
    %842 = vector.broadcast %32 : vector<1x256xf32> to vector<2x256xf32>
    %843 = arith.addf %842, %838 : vector<2x256xf32>
    %844 = arith.addf %843, %841 : vector<2x256xf32>
    %845 = math.tanh %844 : vector<2x256xf32>
    %cst_107 = arith.constant 5.000000e-01 : f32
    %846 = vector.broadcast %cst_107 : f32 to vector<2x256xf32>
    %847 = arith.mulf %846, %845 : vector<2x256xf32>
    %cst_108 = arith.constant 5.000000e-01 : f32
    %848 = vector.broadcast %cst_108 : f32 to vector<2x256xf32>
    %849 = arith.addf %847, %848 : vector<2x256xf32>
    %850 = vector.extract_strided_slice %849 {offsets = [0, 0], sizes = [2, 64], strides = [1, 1]} : vector<2x256xf32> to vector<2x64xf32>
    %851 = vector.extract_strided_slice %849 {offsets = [0, 64], sizes = [2, 64], strides = [1, 1]} : vector<2x256xf32> to vector<2x64xf32>
    %852 = vector.extract_strided_slice %845 {offsets = [0, 128], sizes = [2, 64], strides = [1, 1]} : vector<2x256xf32> to vector<2x64xf32>
    %853 = vector.extract_strided_slice %849 {offsets = [0, 192], sizes = [2, 64], strides = [1, 1]} : vector<2x256xf32> to vector<2x64xf32>
    %854 = arith.mulf %851, %747 : vector<2x64xf32>
    %855 = arith.mulf %850, %852 : vector<2x64xf32>
    %856 = arith.addf %854, %855 : vector<2x64xf32>
    %857 = math.tanh %856 : vector<2x64xf32>
    %858 = arith.mulf %853, %857 : vector<2x64xf32>
    %859 = vector.broadcast %24 : vector<1x64xf32> to vector<2x64xf32>
    %860 = arith.mulf %858, %859 : vector<2x64xf32>
    %cst_109 = arith.constant dense<0.000000e+00> : vector<2xf32>
    %861 = vector.multi_reduction <add>, %860, %cst_109 [1] : vector<2x64xf32> to vector<2xf32>
    %862 = vector.shape_cast %861 : vector<2xf32> to vector<2x1xf32>
    %863 = vector.broadcast %862 : vector<2x1xf32> to vector<2x256xf32>
    %864 = vector.broadcast %10 : vector<1x256xf32> to vector<2x256xf32>
    %865 = arith.mulf %863, %864 : vector<2x256xf32>
    %866 = vector.broadcast %780 : vector<2x1xf32> to vector<2x256xf32>
    %867 = vector.broadcast %18 : vector<1x256xf32> to vector<2x256xf32>
    %868 = arith.mulf %866, %867 : vector<2x256xf32>
    %869 = vector.broadcast %34 : vector<1x256xf32> to vector<2x256xf32>
    %870 = arith.addf %869, %865 : vector<2x256xf32>
    %871 = arith.addf %870, %868 : vector<2x256xf32>
    %872 = math.tanh %871 : vector<2x256xf32>
    %cst_110 = arith.constant 5.000000e-01 : f32
    %873 = vector.broadcast %cst_110 : f32 to vector<2x256xf32>
    %874 = arith.mulf %873, %872 : vector<2x256xf32>
    %cst_111 = arith.constant 5.000000e-01 : f32
    %875 = vector.broadcast %cst_111 : f32 to vector<2x256xf32>
    %876 = arith.addf %874, %875 : vector<2x256xf32>
    %877 = vector.extract_strided_slice %876 {offsets = [0, 0], sizes = [2, 64], strides = [1, 1]} : vector<2x256xf32> to vector<2x64xf32>
    %878 = vector.extract_strided_slice %876 {offsets = [0, 64], sizes = [2, 64], strides = [1, 1]} : vector<2x256xf32> to vector<2x64xf32>
    %879 = vector.extract_strided_slice %872 {offsets = [0, 128], sizes = [2, 64], strides = [1, 1]} : vector<2x256xf32> to vector<2x64xf32>
    %880 = vector.extract_strided_slice %876 {offsets = [0, 192], sizes = [2, 64], strides = [1, 1]} : vector<2x256xf32> to vector<2x64xf32>
    %881 = arith.mulf %878, %774 : vector<2x64xf32>
    %882 = arith.mulf %877, %879 : vector<2x64xf32>
    %883 = arith.addf %881, %882 : vector<2x64xf32>
    %884 = math.tanh %883 : vector<2x64xf32>
    %885 = arith.mulf %880, %884 : vector<2x64xf32>
    %886 = vector.broadcast %26 : vector<1x64xf32> to vector<2x64xf32>
    %887 = arith.mulf %885, %886 : vector<2x64xf32>
    %cst_112 = arith.constant dense<0.000000e+00> : vector<2xf32>
    %888 = vector.multi_reduction <add>, %887, %cst_112 [1] : vector<2x64xf32> to vector<2xf32>
    %889 = vector.shape_cast %888 : vector<2xf32> to vector<2x1xf32>
    %890 = vector.broadcast %889 : vector<2x1xf32> to vector<2x256xf32>
    %891 = vector.broadcast %12 : vector<1x256xf32> to vector<2x256xf32>
    %892 = arith.mulf %890, %891 : vector<2x256xf32>
    %893 = vector.broadcast %807 : vector<2x1xf32> to vector<2x256xf32>
    %894 = vector.broadcast %20 : vector<1x256xf32> to vector<2x256xf32>
    %895 = arith.mulf %893, %894 : vector<2x256xf32>
    %896 = vector.broadcast %36 : vector<1x256xf32> to vector<2x256xf32>
    %897 = arith.addf %896, %892 : vector<2x256xf32>
    %898 = arith.addf %897, %895 : vector<2x256xf32>
    %899 = math.tanh %898 : vector<2x256xf32>
    %cst_113 = arith.constant 5.000000e-01 : f32
    %900 = vector.broadcast %cst_113 : f32 to vector<2x256xf32>
    %901 = arith.mulf %900, %899 : vector<2x256xf32>
    %cst_114 = arith.constant 5.000000e-01 : f32
    %902 = vector.broadcast %cst_114 : f32 to vector<2x256xf32>
    %903 = arith.addf %901, %902 : vector<2x256xf32>
    %904 = vector.extract_strided_slice %903 {offsets = [0, 0], sizes = [2, 64], strides = [1, 1]} : vector<2x256xf32> to vector<2x64xf32>
    %905 = vector.extract_strided_slice %903 {offsets = [0, 64], sizes = [2, 64], strides = [1, 1]} : vector<2x256xf32> to vector<2x64xf32>
    %906 = vector.extract_strided_slice %899 {offsets = [0, 128], sizes = [2, 64], strides = [1, 1]} : vector<2x256xf32> to vector<2x64xf32>
    %907 = vector.extract_strided_slice %903 {offsets = [0, 192], sizes = [2, 64], strides = [1, 1]} : vector<2x256xf32> to vector<2x64xf32>
    %908 = arith.mulf %905, %801 : vector<2x64xf32>
    %909 = arith.mulf %904, %906 : vector<2x64xf32>
    %910 = arith.addf %908, %909 : vector<2x64xf32>
    %911 = math.tanh %910 : vector<2x64xf32>
    %912 = arith.mulf %907, %911 : vector<2x64xf32>
    %913 = vector.broadcast %28 : vector<1x64xf32> to vector<2x64xf32>
    %914 = arith.mulf %912, %913 : vector<2x64xf32>
    %cst_115 = arith.constant dense<0.000000e+00> : vector<2xf32>
    %915 = vector.multi_reduction <add>, %914, %cst_115 [1] : vector<2x64xf32> to vector<2xf32>
    %916 = vector.shape_cast %915 : vector<2xf32> to vector<2x1xf32>
    %917 = tpu.concatenate %262, %371, %480, %589, %698, %807, %916 in 1 : vector<2x1xf32>, vector<2x1xf32>, vector<2x1xf32>, vector<2x1xf32>, vector<2x1xf32>, vector<2x1xf32>, vector<2x1xf32> -> vector<2x7xf32>
    %c0_116 = arith.constant 0 : index
    %c0_117 = arith.constant 0 : index
    %918 = vector.load %arg5[%c0_116, %c0_117] : memref<2x7xf32, #tpu.memory_space<vmem>>, vector<2x7xf32>
    tpu.vector_store %arg5[%c0_116, %c0_117], %917 {strides = array<i32>} : memref<2x7xf32, #tpu.memory_space<vmem>>, vector<2x7xf32>,
    return
  }
}

</mosaic_0001>

<llo_original>
// kernel: lstm_benchmark_forward.1
$region0: #{lstm_benchmark_forward.1}
  #allocation0 [shape = 'u32[]', space=smem, size = 0x4, offset = 0x4, fixed_abs, tag = 'smem constant byte address 0x4 - core index']
  #allocation1 [shape = 'u32[144,128]{1,0:T(1,128)}', space=vmem, size = 0x12000, scoped, tag = 'internal scratch']
  %s0 = inlined_call_operand.vmem [shape: f32[2,8], index: 0, kind: input, shape index: {}]
  %s1 = inlined_call_operand.hbm [shape: f32[4,1,256], index: 1, kind: input, shape index: {}]
  %s2 = inlined_call_operand.vmem [shape: f32[4,1,256], index: 2, kind: input, shape index: {}]
  %s3 = inlined_call_operand.hbm [shape: f32[4,1,256], index: 3, kind: input, shape index: {}]
  %s4 = inlined_call_operand.vmem [shape: f32[4,1,64], index: 4, kind: input, shape index: {}]
  %s5 = inlined_call_operand.hbm [shape: f32[2,7], index: 5, kind: output, shape index: {}]
  %s6 = sld [smem:[#allocation0]]
  $region38: #{lstm_benchmark_forward.1} parent=0
    _
  %s8 = ssub.s32 1, %s6
  %s9 = scalar_select 0, %s8, %s6
  $region1: #{lstm_benchmark_forward.1} parent=0
    #allocation2 [shape = 'u8[4096]{0}', space=vmem, size = 0x1000, scoped, tag = 'input window, operand 1, single buffered']
    #allocation3 [shape = 's32[1]{0}', space=sflag, size = 0x4, scoped, tag = 'scoped memory for lstm_benchmark_forward.1']
    #allocation4 [shape = 's32[1]{0}', space=sflag, size = 0x4, scoped, tag = 'scoped memory for lstm_benchmark_forward.1']
    #allocation5 [shape = 'u8[4096]{0}', space=vmem, size = 0x1000, scoped, tag = 'input window, operand 3, single buffered']
    #allocation6 [shape = 's32[1]{0}', space=sflag, size = 0x4, scoped, tag = 'scoped memory for lstm_benchmark_forward.1']
    #allocation7 [shape = 'u8[1024]{0}', space=vmem, size = 0x400, scoped, tag = 'output window, operand 0, single buffered']
    %10 = vsyncpa [#allocation3], 0
    %11 = vsyncpa [#allocation6], 0
    %12 = vsyncpa [#allocation4], 0
    // Predicated region
    $region2: #{lstm_benchmark_forward.1} parent=1 // pred_check
      _
    $region3: #{lstm_benchmark_forward.1} parent=1 // pred_check_branch
      %14 = sbr.rel (0) target = $region5
    $region4: #{lstm_benchmark_forward.1} parent=1 // pred_region
      _
    $region5: #{lstm_benchmark_forward.1} parent=1 // pred_fallthru
      _
    // Predicated region
    $region6: #{lstm_benchmark_forward.1} parent=1 // pred_check
      _
    $region7: #{lstm_benchmark_forward.1} parent=1 // pred_check_branch
      %16 = sbr.rel (0) target = $region9
    $region8: #{lstm_benchmark_forward.1} parent=1 // pred_region
      %s18 = ssub.s32 128, 128
      %19 = vsyncadd [#allocation3], %s18
      %s20 = sshll.u32 [#allocation2], 4
      %s21 = int_to_ptr.vmem [resolvable:$true] %s20
      %26 = dma.hbm_to_vmem [thread:$0]  %s1, 128, %s21, [#allocation3], 32, 32, 2
    $region9: #{lstm_benchmark_forward.1} parent=1 // pred_fallthru
      _
    // Predicated region
    $region10: #{lstm_benchmark_forward.1} parent=1 // pred_check
      _
    $region11: #{lstm_benchmark_forward.1} parent=1 // pred_check_branch
      %28 = sbr.rel (0) target = $region13
    $region12: #{lstm_benchmark_forward.1} parent=1 // pred_region
      _
    $region13: #{lstm_benchmark_forward.1} parent=1 // pred_fallthru
      _
    // Predicated region
    $region14: #{lstm_benchmark_forward.1} parent=1 // pred_check
      _
    $region15: #{lstm_benchmark_forward.1} parent=1 // pred_check_branch
      %30 = sbr.rel (0) target = $region17
    $region16: #{lstm_benchmark_forward.1} parent=1 // pred_region
      %s32 = ssub.s32 128, 128
      %33 = vsyncadd [#allocation6], %s32
      %s34 = sshll.u32 [#allocation5], 4
      %s35 = int_to_ptr.vmem [resolvable:$true] %s34
      %40 = dma.hbm_to_vmem [thread:$0]  %s3, 128, %s35, [#allocation6], 32, 32, 2
    $region17: #{lstm_benchmark_forward.1} parent=1 // pred_fallthru
      _
    // Predicated region
    $region18: #{lstm_benchmark_forward.1} parent=1 // pred_check
      _
    $region19: #{lstm_benchmark_forward.1} parent=1 // pred_check_branch
      %42 = sbr.rel (0) target = $region21
    $region20: #{lstm_benchmark_forward.1} parent=1 // pred_region
      _
    $region21: #{lstm_benchmark_forward.1} parent=1 // pred_fallthru
      _
    // Predicated region
    $region22: #{lstm_benchmark_forward.1} parent=1 // pred_check
      _
    $region23: #{lstm_benchmark_forward.1} parent=1 // pred_check_branch
      %44 = sbr.rel (0) target = $region25
    $region24: #{lstm_benchmark_forward.1} parent=1 // pred_region
      %45 = dma.done [#allocation3], 128
    $region25: #{lstm_benchmark_forward.1} parent=1 // pred_fallthru
      _
    // Predicated region
    $region26: #{lstm_benchmark_forward.1} parent=1 // pred_check
      _
    $region27: #{lstm_benchmark_forward.1} parent=1 // pred_check_branch
      %47 = sbr.rel (0) target = $region29
    $region28: #{lstm_benchmark_forward.1} parent=1 // pred_region
      %48 = dma.done [#allocation6], 128
    $region29: #{lstm_benchmark_forward.1} parent=1 // pred_fallthru
      _
    %v49 = vld [vmem:[%s0] sm:$0x3]
    %v50 = vld [vmem:[#allocation2] sm:$0x3]
    %v51 = vld [vmem:[#allocation2 + $0x2] sm:$0x3]
    %v52 = vld [vmem:[#allocation2 + $0x4] sm:$0x3]
    %v53 = vld [vmem:[#allocation2 + $0x6] sm:$0x3]
    %v54 = vld [vmem:[%s2] sm:$0x3]
    %v55 = vld [vmem:[%s2 + $0x2] sm:$0x3]
    %v56 = vld [vmem:[%s2 + $0x4] sm:$0x3]
    %v57 = vld [vmem:[%s2 + $0x6] sm:$0x3]
    %v58 = vld [vmem:[#allocation5] sm:$0x3]
    %v59 = vld [vmem:[#allocation5 + $0x2] sm:$0x3]
    %v60 = vld [vmem:[#allocation5 + $0x4] sm:$0x3]
    %v61 = vld [vmem:[#allocation5 + $0x6] sm:$0x3]
    %v62 = vld [vmem:[%s4] sm:$0x1]
    %v63 = vld [vmem:[%s4 + $0x1] sm:$0x1]
    %v64 = vld [vmem:[%s4 + $0x2] sm:$0x1]
    %v65 = vld [vmem:[%s4 + $0x3] sm:$0x1]
    %67 = vset.pattern.permute.xlu0 0
    %68 = vperm.xlu0 %67, %v49
    %v69 = vpop.permute.xlu0 %68
    %v72 = vlaneseq
    %v73 = vshrl.u32 %v72, 7
    %v74 = vsub.s32 0, %v73
    %v75 = vrot.slane %v50, %v74
    %v76 = vlaneseq
    %v77 = vshrl.u32 %v76, 7
    %v78 = vsub.s32 1, %v77
    %v79 = vrot.slane %v50, %v78
    %v82 = vmul.f32 %v69, %v75
    %v83 = vmul.f32 %v69, %v79
    %v85 = vlaneseq
    %v86 = vshrl.u32 %v85, 7
    %v87 = vsub.s32 0, %v86
    %v88 = vrot.slane %v54, %v87
    %v89 = vlaneseq
    %v90 = vshrl.u32 %v89, 7
    %v91 = vsub.s32 1, %v90
    %v92 = vrot.slane %v54, %v91
    %v95 = vmul.f32 %v88, 0.0
    %v96 = vmul.f32 %v92, 0.0
    %v98 = vlaneseq
    %v99 = vshrl.u32 %v98, 7
    %v100 = vsub.s32 0, %v99
    %v101 = vrot.slane %v58, %v100
    %v102 = vlaneseq
    %v103 = vshrl.u32 %v102, 7
    %v104 = vsub.s32 1, %v103
    %v105 = vrot.slane %v58, %v104
    %v108 = vadd.f32 %v101, %v82
    %v109 = vadd.f32 %v105, %v83
    %v110 = vadd.f32 %v108, %v95
    %v111 = vadd.f32 %v109, %v96
    %v112 = vtanh.pop %v110
    %v113 = vtanh.pop %v111
    %v114 = vmul.f32 %v112, 0.5
    %v115 = vmul.f32 %v113, 0.5
    %v116 = vadd.f32 %v114, 0.5
    %v117 = vadd.f32 %v115, 0.5
    %v118 = vmul.f32 %v116, 0.0
    %v119 = vmul.f32 %v116, %v113
    %121 = vrot.lane.b32.xlu0 %v119, 64
    %v122 = vpop.permute.xlu0 %121
    %v124 = vadd.f32 %v118, %v122
    %v125 = vtanh.pop %v124
    %v126 = vmul.f32 %v117, %v125
    %v128 = vlaneseq
    %v129 = vshrl.u32 %v128, 7
    %v130 = vsub.s32 0, %v129
    %v131 = vrot.slane %v62, %v130
    %132 = vrot.lane.b32.xlu0 %v131, 64
    %v133 = vpop.permute.xlu0 %132
    %v135 = vmul.f32 %v126, %v133
    %137 = vrot.lane.b32.xlu0 %v135, 64
    %v138 = vpop.permute.xlu0 %137
    %vm140 = vcmask 517120
    %v141 = vsel %vm140, %v138, 0.0
    %142 = vadd.xlane.f32.xlu0 %v141
    %v143 = vpop.xlane.xlu0 %142
    %v145 = vlaneseq
    %v146 = vshrl.u32 %v145, 7
    %v147 = vsub.s32 0, %v146
    %v148 = vrot.slane %v51, %v147
    %v149 = vlaneseq
    %v150 = vshrl.u32 %v149, 7
    %v151 = vsub.s32 1, %v150
    %v152 = vrot.slane %v51, %v151
    %v155 = vmul.f32 %v143, %v148
    %v156 = vmul.f32 %v143, %v152
    %v158 = vlaneseq
    %v159 = vshrl.u32 %v158, 7
    %v160 = vsub.s32 0, %v159
    %v161 = vrot.slane %v55, %v160
    %v162 = vlaneseq
    %v163 = vshrl.u32 %v162, 7
    %v164 = vsub.s32 1, %v163
    %v165 = vrot.slane %v55, %v164
    %v168 = vmul.f32 %v161, 0.0
    %v169 = vmul.f32 %v165, 0.0
    %v171 = vlaneseq
    %v172 = vshrl.u32 %v171, 7
    %v173 = vsub.s32 0, %v172
    %v174 = vrot.slane %v59, %v173
    %v175 = vlaneseq
    %v176 = vshrl.u32 %v175, 7
    %v177 = vsub.s32 1, %v176
    %v178 = vrot.slane %v59, %v177
    %v181 = vadd.f32 %v174, %v155
    %v182 = vadd.f32 %v178, %v156
    %v183 = vadd.f32 %v181, %v168
    %v184 = vadd.f32 %v182, %v169
    %v185 = vtanh.pop %v183
    %v186 = vtanh.pop %v184
    %v187 = vmul.f32 %v185, 0.5
    %v188 = vmul.f32 %v186, 0.5
    %v189 = vadd.f32 %v187, 0.5
    %v190 = vadd.f32 %v188, 0.5
    %v191 = vmul.f32 %v189, 0.0
    %v192 = vmul.f32 %v189, %v186
    %194 = vrot.lane.b32.xlu0 %v192, 64
    %v195 = vpop.permute.xlu0 %194
    %v197 = vadd.f32 %v191, %v195
    %v198 = vtanh.pop %v197
    %v199 = vmul.f32 %v190, %v198
    %v201 = vlaneseq
    %v202 = vshrl.u32 %v201, 7
    %v203 = vsub.s32 0, %v202
    %v204 = vrot.slane %v63, %v203
    %205 = vrot.lane.b32.xlu0 %v204, 64
    %v206 = vpop.permute.xlu0 %205
    %v208 = vmul.f32 %v199, %v206
    %210 = vrot.lane.b32.xlu0 %v208, 64
    %v211 = vpop.permute.xlu0 %210
    %v213 = vsel %vm140, %v211, 0.0
    %214 = vadd.xlane.f32.xlu0 %v213
    %v215 = vpop.xlane.xlu0 %214
    %v217 = vlaneseq
    %v218 = vshrl.u32 %v217, 7
    %v219 = vsub.s32 0, %v218
    %v220 = vrot.slane %v52, %v219
    %v221 = vlaneseq
    %v222 = vshrl.u32 %v221, 7
    %v223 = vsub.s32 1, %v222
    %v224 = vrot.slane %v52, %v223
    %v227 = vmul.f32 %v215, %v220
    %v228 = vmul.f32 %v215, %v224
    %v230 = vlaneseq
    %v231 = vshrl.u32 %v230, 7
    %v232 = vsub.s32 0, %v231
    %v233 = vrot.slane %v56, %v232
    %v234 = vlaneseq
    %v235 = vshrl.u32 %v234, 7
    %v236 = vsub.s32 1, %v235
    %v237 = vrot.slane %v56, %v236
    %v240 = vmul.f32 %v233, 0.0
    %v241 = vmul.f32 %v237, 0.0
    %v243 = vlaneseq
    %v244 = vshrl.u32 %v243, 7
    %v245 = vsub.s32 0, %v244
    %v246 = vrot.slane %v60, %v245
    %v247 = vlaneseq
    %v248 = vshrl.u32 %v247, 7
    %v249 = vsub.s32 1, %v248
    %v250 = vrot.slane %v60, %v249
    %v253 = vadd.f32 %v246, %v227
    %v254 = vadd.f32 %v250, %v228
    %v255 = vadd.f32 %v253, %v240
    %v256 = vadd.f32 %v254, %v241
    %v257 = vtanh.pop %v255
    %v258 = vtanh.pop %v256
    %v259 = vmul.f32 %v257, 0.5
    %v260 = vmul.f32 %v258, 0.5
    %v261 = vadd.f32 %v259, 0.5
    %v262 = vadd.f32 %v260, 0.5
    %v263 = vmul.f32 %v261, 0.0
    %v264 = vmul.f32 %v261, %v258
    %266 = vrot.lane.b32.xlu0 %v264, 64
    %v267 = vpop.permute.xlu0 %266
    %v269 = vadd.f32 %v263, %v267
    %v270 = vtanh.pop %v269
    %v271 = vmul.f32 %v262, %v270
    %v273 = vlaneseq
    %v274 = vshrl.u32 %v273, 7
    %v275 = vsub.s32 0, %v274
    %v276 = vrot.slane %v64, %v275
    %277 = vrot.lane.b32.xlu0 %v276, 64
    %v278 = vpop.permute.xlu0 %277
    %v280 = vmul.f32 %v271, %v278
    %282 = vrot.lane.b32.xlu0 %v280, 64
    %v283 = vpop.permute.xlu0 %282
    %v285 = vsel %vm140, %v283, 0.0
    %286 = vadd.xlane.f32.xlu0 %v285
    %v287 = vpop.xlane.xlu0 %286
    %v289 = vlaneseq
    %v290 = vshrl.u32 %v289, 7
    %v291 = vsub.s32 0, %v290
    %v292 = vrot.slane %v53, %v291
    %v293 = vlaneseq
    %v294 = vshrl.u32 %v293, 7
    %v295 = vsub.s32 1, %v294
    %v296 = vrot.slane %v53, %v295
    %v299 = vmul.f32 %v287, %v292
    %v300 = vmul.f32 %v287, %v296
    %v302 = vlaneseq
    %v303 = vshrl.u32 %v302, 7
    %v304 = vsub.s32 0, %v303
    %v305 = vrot.slane %v57, %v304
    %v306 = vlaneseq
    %v307 = vshrl.u32 %v306, 7
    %v308 = vsub.s32 1, %v307
    %v309 = vrot.slane %v57, %v308
    %v312 = vmul.f32 %v305, 0.0
    %v313 = vmul.f32 %v309, 0.0
    %v315 = vlaneseq
    %v316 = vshrl.u32 %v315, 7
    %v317 = vsub.s32 0, %v316
    %v318 = vrot.slane %v61, %v317
    %v319 = vlaneseq
    %v320 = vshrl.u32 %v319, 7
    %v321 = vsub.s32 1, %v320
    %v322 = vrot.slane %v61, %v321
    %v325 = vadd.f32 %v318, %v299
    %v326 = vadd.f32 %v322, %v300
    %v327 = vadd.f32 %v325, %v312
    %v328 = vadd.f32 %v326, %v313
    %v329 = vtanh.pop %v327
    %v330 = vtanh.pop %v328
    %v331 = vmul.f32 %v329, 0.5
    %v332 = vmul.f32 %v330, 0.5
    %v333 = vadd.f32 %v331, 0.5
    %v334 = vadd.f32 %v332, 0.5
    %v335 = vmul.f32 %v333, 0.0
    %v336 = vmul.f32 %v333, %v330
    %338 = vrot.lane.b32.xlu0 %v336, 64
    %v339 = vpop.permute.xlu0 %338
    %v341 = vadd.f32 %v335, %v339
    %v342 = vtanh.pop %v341
    %v343 = vmul.f32 %v334, %v342
    %v345 = vlaneseq
    %v346 = vshrl.u32 %v345, 7
    %v347 = vsub.s32 0, %v346
    %v348 = vrot.slane %v65, %v347
    %349 = vrot.lane.b32.xlu0 %v348, 64
    %v350 = vpop.permute.xlu0 %349
    %v352 = vmul.f32 %v343, %v350
    %354 = vrot.lane.b32.xlu0 %v352, 64
    %v355 = vpop.permute.xlu0 %354
    %v357 = vsel %vm140, %v355, 0.0
    %358 = vadd.xlane.f32.xlu0 %v357
    %v359 = vpop.xlane.xlu0 %358
    %360 = vset.pattern.permute.xlu0 1
    %361 = vperm.xlu0 %360, %v49
    %v362 = vpop.permute.xlu0 %361
    %v364 = vmul.f32 %v362, %v75
    %v365 = vmul.f32 %v362, %v79
    %v366 = vmul.f32 %v143, %v88
    %v367 = vmul.f32 %v143, %v92
    %v368 = vadd.f32 %v101, %v364
    %v369 = vadd.f32 %v105, %v365
    %v370 = vadd.f32 %v368, %v366
    %v371 = vadd.f32 %v369, %v367
    %v372 = vtanh.pop %v370
    %v373 = vtanh.pop %v371
    %v374 = vmul.f32 %v372, 0.5
    %v375 = vmul.f32 %v373, 0.5
    %v376 = vadd.f32 %v374, 0.5
    %v377 = vadd.f32 %v375, 0.5
    %v378 = vmul.f32 %v376, %v124
    %v379 = vmul.f32 %v376, %v373
    %381 = vrot.lane.b32.xlu0 %v379, 64
    %v382 = vpop.permute.xlu0 %381
    %v384 = vadd.f32 %v378, %v382
    %v385 = vtanh.pop %v384
    %v386 = vmul.f32 %v377, %v385
    %v387 = vmul.f32 %v386, %v133
    %389 = vrot.lane.b32.xlu0 %v387, 64
    %v390 = vpop.permute.xlu0 %389
    %v392 = vsel %vm140, %v390, 0.0
    %393 = vadd.xlane.f32.xlu0 %v392
    %v394 = vpop.xlane.xlu0 %393
    %v395 = vmul.f32 %v394, %v148
    %v396 = vmul.f32 %v394, %v152
    %v397 = vmul.f32 %v215, %v161
    %v398 = vmul.f32 %v215, %v165
    %v399 = vadd.f32 %v174, %v395
    %v400 = vadd.f32 %v178, %v396
    %v401 = vadd.f32 %v399, %v397
    %v402 = vadd.f32 %v400, %v398
    %v403 = vtanh.pop %v401
    %v404 = vtanh.pop %v402
    %v405 = vmul.f32 %v403, 0.5
    %v406 = vmul.f32 %v404, 0.5
    %v407 = vadd.f32 %v405, 0.5
    %v408 = vadd.f32 %v406, 0.5
    %v409 = vmul.f32 %v407, %v197
    %v410 = vmul.f32 %v407, %v404
    %412 = vrot.lane.b32.xlu0 %v410, 64
    %v413 = vpop.permute.xlu0 %412
    %v415 = vadd.f32 %v409, %v413
    %v416 = vtanh.pop %v415
    %v417 = vmul.f32 %v408, %v416
    %v418 = vmul.f32 %v417, %v206
    %420 = vrot.lane.b32.xlu0 %v418, 64
    %v421 = vpop.permute.xlu0 %420
    %v423 = vsel %vm140, %v421, 0.0
    %424 = vadd.xlane.f32.xlu0 %v423
    %v425 = vpop.xlane.xlu0 %424
    %v426 = vmul.f32 %v425, %v220
    %v427 = vmul.f32 %v425, %v224
    %v428 = vmul.f32 %v287, %v233
    %v429 = vmul.f32 %v287, %v237
    %v430 = vadd.f32 %v246, %v426
    %v431 = vadd.f32 %v250, %v427
    %v432 = vadd.f32 %v430, %v428
    %v433 = vadd.f32 %v431, %v429
    %v434 = vtanh.pop %v432
    %v435 = vtanh.pop %v433
    %v436 = vmul.f32 %v434, 0.5
    %v437 = vmul.f32 %v435, 0.5
    %v438 = vadd.f32 %v436, 0.5
    %v439 = vadd.f32 %v437, 0.5
    %v440 = vmul.f32 %v438, %v269
    %v441 = vmul.f32 %v438, %v435
    %443 = vrot.lane.b32.xlu0 %v441, 64
    %v444 = vpop.permute.xlu0 %443
    %v446 = vadd.f32 %v440, %v444
    %v447 = vtanh.pop %v446
    %v448 = vmul.f32 %v439, %v447
    %v449 = vmul.f32 %v448, %v278
    %451 = vrot.lane.b32.xlu0 %v449, 64
    %v452 = vpop.permute.xlu0 %451
    %v454 = vsel %vm140, %v452, 0.0
    %455 = vadd.xlane.f32.xlu0 %v454
    %v456 = vpop.xlane.xlu0 %455
    %v457 = vmul.f32 %v456, %v292
    %v458 = vmul.f32 %v456, %v296
    %v459 = vmul.f32 %v359, %v305
    %v460 = vmul.f32 %v359, %v309
    %v461 = vadd.f32 %v318, %v457
    %v462 = vadd.f32 %v322, %v458
    %v463 = vadd.f32 %v461, %v459
    %v464 = vadd.f32 %v462, %v460
    %v465 = vtanh.pop %v463
    %v466 = vtanh.pop %v464
    %v467 = vmul.f32 %v465, 0.5
    %v468 = vmul.f32 %v466, 0.5
    %v469 = vadd.f32 %v467, 0.5
    %v470 = vadd.f32 %v468, 0.5
    %v471 = vmul.f32 %v469, %v341
    %v472 = vmul.f32 %v469, %v466
    %474 = vrot.lane.b32.xlu0 %v472, 64
    %v475 = vpop.permute.xlu0 %474
    %v477 = vadd.f32 %v471, %v475
    %v478 = vtanh.pop %v477
    %v479 = vmul.f32 %v470, %v478
    %v480 = vmul.f32 %v479, %v350
    %482 = vrot.lane.b32.xlu0 %v480, 64
    %v483 = vpop.permute.xlu0 %482
    %v485 = vsel %vm140, %v483, 0.0
    %486 = vadd.xlane.f32.xlu0 %v485
    %v487 = vpop.xlane.xlu0 %486
    %488 = vset.pattern.permute.xlu0 2
    %489 = vperm.xlu0 %488, %v49
    %v490 = vpop.permute.xlu0 %489
    %v492 = vmul.f32 %v490, %v75
    %v493 = vmul.f32 %v490, %v79
    %v494 = vmul.f32 %v394, %v88
    %v495 = vmul.f32 %v394, %v92
    %v496 = vadd.f32 %v101, %v492
    %v497 = vadd.f32 %v105, %v493
    %v498 = vadd.f32 %v496, %v494
    %v499 = vadd.f32 %v497, %v495
    %v500 = vtanh.pop %v498
    %v501 = vtanh.pop %v499
    %v502 = vmul.f32 %v500, 0.5
    %v503 = vmul.f32 %v501, 0.5
    %v504 = vadd.f32 %v502, 0.5
    %v505 = vadd.f32 %v503, 0.5
    %v506 = vmul.f32 %v504, %v384
    %v507 = vmul.f32 %v504, %v501
    %509 = vrot.lane.b32.xlu0 %v507, 64
    %v510 = vpop.permute.xlu0 %509
    %v512 = vadd.f32 %v506, %v510
    %v513 = vtanh.pop %v512
    %v514 = vmul.f32 %v505, %v513
    %v515 = vmul.f32 %v514, %v133
    %517 = vrot.lane.b32.xlu0 %v515, 64
    %v518 = vpop.permute.xlu0 %517
    %v520 = vsel %vm140, %v518, 0.0
    %521 = vadd.xlane.f32.xlu0 %v520
    %v522 = vpop.xlane.xlu0 %521
    %v523 = vmul.f32 %v522, %v148
    %v524 = vmul.f32 %v522, %v152
    %v525 = vmul.f32 %v425, %v161
    %v526 = vmul.f32 %v425, %v165
    %v527 = vadd.f32 %v174, %v523
    %v528 = vadd.f32 %v178, %v524
    %v529 = vadd.f32 %v527, %v525
    %v530 = vadd.f32 %v528, %v526
    %v531 = vtanh.pop %v529
    %v532 = vtanh.pop %v530
    %v533 = vmul.f32 %v531, 0.5
    %v534 = vmul.f32 %v532, 0.5
    %v535 = vadd.f32 %v533, 0.5
    %v536 = vadd.f32 %v534, 0.5
    %v537 = vmul.f32 %v535, %v415
    %v538 = vmul.f32 %v535, %v532
    %540 = vrot.lane.b32.xlu0 %v538, 64
    %v541 = vpop.permute.xlu0 %540
    %v543 = vadd.f32 %v537, %v541
    %v544 = vtanh.pop %v543
    %v545 = vmul.f32 %v536, %v544
    %v546 = vmul.f32 %v545, %v206
    %548 = vrot.lane.b32.xlu0 %v546, 64
    %v549 = vpop.permute.xlu0 %548
    %v551 = vsel %vm140, %v549, 0.0
    %552 = vadd.xlane.f32.xlu0 %v551
    %v553 = vpop.xlane.xlu0 %552
    %v554 = vmul.f32 %v553, %v220
    %v555 = vmul.f32 %v553, %v224
    %v556 = vmul.f32 %v456, %v233
    %v557 = vmul.f32 %v456, %v237
    %v558 = vadd.f32 %v246, %v554
    %v559 = vadd.f32 %v250, %v555
    %v560 = vadd.f32 %v558, %v556
    %v561 = vadd.f32 %v559, %v557
    %v562 = vtanh.pop %v560
    %v563 = vtanh.pop %v561
    %v564 = vmul.f32 %v562, 0.5
    %v565 = vmul.f32 %v563, 0.5
    %v566 = vadd.f32 %v564, 0.5
    %v567 = vadd.f32 %v565, 0.5
    %v568 = vmul.f32 %v566, %v446
    %v569 = vmul.f32 %v566, %v563
    %571 = vrot.lane.b32.xlu0 %v569, 64
    %v572 = vpop.permute.xlu0 %571
    %v574 = vadd.f32 %v568, %v572
    %v575 = vtanh.pop %v574
    %v576 = vmul.f32 %v567, %v575
    %v577 = vmul.f32 %v576, %v278
    %579 = vrot.lane.b32.xlu0 %v577, 64
    %v580 = vpop.permute.xlu0 %579
    %v582 = vsel %vm140, %v580, 0.0
    %583 = vadd.xlane.f32.xlu0 %v582
    %v584 = vpop.xlane.xlu0 %583
    %v585 = vmul.f32 %v584, %v292
    %v586 = vmul.f32 %v584, %v296
    %v587 = vmul.f32 %v487, %v305
    %v588 = vmul.f32 %v487, %v309
    %v589 = vadd.f32 %v318, %v585
    %v590 = vadd.f32 %v322, %v586
    %v591 = vadd.f32 %v589, %v587
    %v592 = vadd.f32 %v590, %v588
    %v593 = vtanh.pop %v591
    %v594 = vtanh.pop %v592
    %v595 = vmul.f32 %v593, 0.5
    %v596 = vmul.f32 %v594, 0.5
    %v597 = vadd.f32 %v595, 0.5
    %v598 = vadd.f32 %v596, 0.5
    %v599 = vmul.f32 %v597, %v477
    %v600 = vmul.f32 %v597, %v594
    %602 = vrot.lane.b32.xlu0 %v600, 64
    %v603 = vpop.permute.xlu0 %602
    %v605 = vadd.f32 %v599, %v603
    %v606 = vtanh.pop %v605
    %v607 = vmul.f32 %v598, %v606
    %v608 = vmul.f32 %v607, %v350
    %610 = vrot.lane.b32.xlu0 %v608, 64
    %v611 = vpop.permute.xlu0 %610
    %v613 = vsel %vm140, %v611, 0.0
    %614 = vadd.xlane.f32.xlu0 %v613
    %v615 = vpop.xlane.xlu0 %614
    %616 = vset.pattern.permute.xlu0 3
    %617 = vperm.xlu0 %616, %v49
    %v618 = vpop.permute.xlu0 %617
    %v620 = vmul.f32 %v618, %v75
    %v621 = vmul.f32 %v618, %v79
    %v622 = vmul.f32 %v522, %v88
    %v623 = vmul.f32 %v522, %v92
    %v624 = vadd.f32 %v101, %v620
    %v625 = vadd.f32 %v105, %v621
    %v626 = vadd.f32 %v624, %v622
    %v627 = vadd.f32 %v625, %v623
    %v628 = vtanh.pop %v626
    %v629 = vtanh.pop %v627
    %v630 = vmul.f32 %v628, 0.5
    %v631 = vmul.f32 %v629, 0.5
    %v632 = vadd.f32 %v630, 0.5
    %v633 = vadd.f32 %v631, 0.5
    %v634 = vmul.f32 %v632, %v512
    %v635 = vmul.f32 %v632, %v629
    %637 = vrot.lane.b32.xlu0 %v635, 64
    %v638 = vpop.permute.xlu0 %637
    %v640 = vadd.f32 %v634, %v638
    %v641 = vtanh.pop %v640
    %v642 = vmul.f32 %v633, %v641
    %v643 = vmul.f32 %v642, %v133
    %645 = vrot.lane.b32.xlu0 %v643, 64
    %v646 = vpop.permute.xlu0 %645
    %v648 = vsel %vm140, %v646, 0.0
    %649 = vadd.xlane.f32.xlu0 %v648
    %v650 = vpop.xlane.xlu0 %649
    %v651 = vmul.f32 %v650, %v148
    %v652 = vmul.f32 %v650, %v152
    %v653 = vmul.f32 %v553, %v161
    %v654 = vmul.f32 %v553, %v165
    %v655 = vadd.f32 %v174, %v651
    %v656 = vadd.f32 %v178, %v652
    %v657 = vadd.f32 %v655, %v653
    %v658 = vadd.f32 %v656, %v654
    %v659 = vtanh.pop %v657
    %v660 = vtanh.pop %v658
    %v661 = vmul.f32 %v659, 0.5
    %v662 = vmul.f32 %v660, 0.5
    %v663 = vadd.f32 %v661, 0.5
    %v664 = vadd.f32 %v662, 0.5
    %v665 = vmul.f32 %v663, %v543
    %v666 = vmul.f32 %v663, %v660
    %668 = vrot.lane.b32.xlu0 %v666, 64
    %v669 = vpop.permute.xlu0 %668
    %v671 = vadd.f32 %v665, %v669
    %v672 = vtanh.pop %v671
    %v673 = vmul.f32 %v664, %v672
    %v674 = vmul.f32 %v673, %v206
    %676 = vrot.lane.b32.xlu0 %v674, 64
    %v677 = vpop.permute.xlu0 %676
    %v679 = vsel %vm140, %v677, 0.0
    %680 = vadd.xlane.f32.xlu0 %v679
    %v681 = vpop.xlane.xlu0 %680
    %v682 = vmul.f32 %v681, %v220
    %v683 = vmul.f32 %v681, %v224
    %v684 = vmul.f32 %v584, %v233
    %v685 = vmul.f32 %v584, %v237
    %v686 = vadd.f32 %v246, %v682
    %v687 = vadd.f32 %v250, %v683
    %v688 = vadd.f32 %v686, %v684
    %v689 = vadd.f32 %v687, %v685
    %v690 = vtanh.pop %v688
    %v691 = vtanh.pop %v689
    %v692 = vmul.f32 %v690, 0.5
    %v693 = vmul.f32 %v691, 0.5
    %v694 = vadd.f32 %v692, 0.5
    %v695 = vadd.f32 %v693, 0.5
    %v696 = vmul.f32 %v694, %v574
    %v697 = vmul.f32 %v694, %v691
    %699 = vrot.lane.b32.xlu0 %v697, 64
    %v700 = vpop.permute.xlu0 %699
    %v702 = vadd.f32 %v696, %v700
    %v703 = vtanh.pop %v702
    %v704 = vmul.f32 %v695, %v703
    %v705 = vmul.f32 %v704, %v278
    %707 = vrot.lane.b32.xlu0 %v705, 64
    %v708 = vpop.permute.xlu0 %707
    %v710 = vsel %vm140, %v708, 0.0
    %711 = vadd.xlane.f32.xlu0 %v710
    %v712 = vpop.xlane.xlu0 %711
    %v713 = vmul.f32 %v712, %v292
    %v714 = vmul.f32 %v712, %v296
    %v715 = vmul.f32 %v615, %v305
    %v716 = vmul.f32 %v615, %v309
    %v717 = vadd.f32 %v318, %v713
    %v718 = vadd.f32 %v322, %v714
    %v719 = vadd.f32 %v717, %v715
    %v720 = vadd.f32 %v718, %v716
    %v721 = vtanh.pop %v719
    %v722 = vtanh.pop %v720
    %v723 = vmul.f32 %v721, 0.5
    %v724 = vmul.f32 %v722, 0.5
    %v725 = vadd.f32 %v723, 0.5
    %v726 = vadd.f32 %v724, 0.5
    %v727 = vmul.f32 %v725, %v605
    %v728 = vmul.f32 %v725, %v722
    %730 = vrot.lane.b32.xlu0 %v728, 64
    %v731 = vpop.permute.xlu0 %730
    %v733 = vadd.f32 %v727, %v731
    %v734 = vtanh.pop %v733
    %v735 = vmul.f32 %v726, %v734
    %v736 = vmul.f32 %v735, %v350
    %738 = vrot.lane.b32.xlu0 %v736, 64
    %v739 = vpop.permute.xlu0 %738
    %v741 = vsel %vm140, %v739, 0.0
    %742 = vadd.xlane.f32.xlu0 %v741
    %v743 = vpop.xlane.xlu0 %742
    %744 = vset.pattern.permute.xlu0 4
    %745 = vperm.xlu0 %744, %v49
    %v746 = vpop.permute.xlu0 %745
    %v748 = vmul.f32 %v746, %v75
    %v749 = vmul.f32 %v746, %v79
    %v750 = vmul.f32 %v650, %v88
    %v751 = vmul.f32 %v650, %v92
    %v752 = vadd.f32 %v101, %v748
    %v753 = vadd.f32 %v105, %v749
    %v754 = vadd.f32 %v752, %v750
    %v755 = vadd.f32 %v753, %v751
    %v756 = vtanh.pop %v754
    %v757 = vtanh.pop %v755
    %v758 = vmul.f32 %v756, 0.5
    %v759 = vmul.f32 %v757, 0.5
    %v760 = vadd.f32 %v758, 0.5
    %v761 = vadd.f32 %v759, 0.5
    %v762 = vmul.f32 %v760, %v640
    %v763 = vmul.f32 %v760, %v757
    %765 = vrot.lane.b32.xlu0 %v763, 64
    %v766 = vpop.permute.xlu0 %765
    %v768 = vadd.f32 %v762, %v766
    %v769 = vtanh.pop %v768
    %v770 = vmul.f32 %v761, %v769
    %v771 = vmul.f32 %v770, %v133
    %773 = vrot.lane.b32.xlu0 %v771, 64
    %v774 = vpop.permute.xlu0 %773
    %v776 = vsel %vm140, %v774, 0.0
    %777 = vadd.xlane.f32.xlu0 %v776
    %v778 = vpop.xlane.xlu0 %777
    %v779 = vmul.f32 %v778, %v148
    %v780 = vmul.f32 %v778, %v152
    %v781 = vmul.f32 %v681, %v161
    %v782 = vmul.f32 %v681, %v165
    %v783 = vadd.f32 %v174, %v779
    %v784 = vadd.f32 %v178, %v780
    %v785 = vadd.f32 %v783, %v781
    %v786 = vadd.f32 %v784, %v782
    %v787 = vtanh.pop %v785
    %v788 = vtanh.pop %v786
    %v789 = vmul.f32 %v787, 0.5
    %v790 = vmul.f32 %v788, 0.5
    %v791 = vadd.f32 %v789, 0.5
    %v792 = vadd.f32 %v790, 0.5
    %v793 = vmul.f32 %v791, %v671
    %v794 = vmul.f32 %v791, %v788
    %796 = vrot.lane.b32.xlu0 %v794, 64
    %v797 = vpop.permute.xlu0 %796
    %v799 = vadd.f32 %v793, %v797
    %v800 = vtanh.pop %v799
    %v801 = vmul.f32 %v792, %v800
    %v802 = vmul.f32 %v801, %v206
    %804 = vrot.lane.b32.xlu0 %v802, 64
    %v805 = vpop.permute.xlu0 %804
    %v807 = vsel %vm140, %v805, 0.0
    %808 = vadd.xlane.f32.xlu0 %v807
    %v809 = vpop.xlane.xlu0 %808
    %v810 = vmul.f32 %v809, %v220
    %v811 = vmul.f32 %v809, %v224
    %v812 = vmul.f32 %v712, %v233
    %v813 = vmul.f32 %v712, %v237
    %v814 = vadd.f32 %v246, %v810
    %v815 = vadd.f32 %v250, %v811
    %v816 = vadd.f32 %v814, %v812
    %v817 = vadd.f32 %v815, %v813
    %v818 = vtanh.pop %v816
    %v819 = vtanh.pop %v817
    %v820 = vmul.f32 %v818, 0.5
    %v821 = vmul.f32 %v819, 0.5
    %v822 = vadd.f32 %v820, 0.5
    %v823 = vadd.f32 %v821, 0.5
    %v824 = vmul.f32 %v822, %v702
    %v825 = vmul.f32 %v822, %v819
    %827 = vrot.lane.b32.xlu0 %v825, 64
    %v828 = vpop.permute.xlu0 %827
    %v830 = vadd.f32 %v824, %v828
    %v831 = vtanh.pop %v830
    %v832 = vmul.f32 %v823, %v831
    %v833 = vmul.f32 %v832, %v278
    %835 = vrot.lane.b32.xlu0 %v833, 64
    %v836 = vpop.permute.xlu0 %835
    %v838 = vsel %vm140, %v836, 0.0
    %839 = vadd.xlane.f32.xlu0 %v838
    %v840 = vpop.xlane.xlu0 %839
    %v841 = vmul.f32 %v840, %v292
    %v842 = vmul.f32 %v840, %v296
    %v843 = vmul.f32 %v743, %v305
    %v844 = vmul.f32 %v743, %v309
    %v845 = vadd.f32 %v318, %v841
    %v846 = vadd.f32 %v322, %v842
    %v847 = vadd.f32 %v845, %v843
    %v848 = vadd.f32 %v846, %v844
    %v849 = vtanh.pop %v847
    %v850 = vtanh.pop %v848
    %v851 = vmul.f32 %v849, 0.5
    %v852 = vmul.f32 %v850, 0.5
    %v853 = vadd.f32 %v851, 0.5
    %v854 = vadd.f32 %v852, 0.5
    %v855 = vmul.f32 %v853, %v733
    %v856 = vmul.f32 %v853, %v850
    %858 = vrot.lane.b32.xlu0 %v856, 64
    %v859 = vpop.permute.xlu0 %858
    %v861 = vadd.f32 %v855, %v859
    %v862 = vtanh.pop %v861
    %v863 = vmul.f32 %v854, %v862
    %v864 = vmul.f32 %v863, %v350
    %866 = vrot.lane.b32.xlu0 %v864, 64
    %v867 = vpop.permute.xlu0 %866
    %v869 = vsel %vm140, %v867, 0.0
    %870 = vadd.xlane.f32.xlu0 %v869
    %v871 = vpop.xlane.xlu0 %870
    %872 = vset.pattern.permute.xlu0 5
    %873 = vperm.xlu0 %872, %v49
    %v874 = vpop.permute.xlu0 %873
    %v876 = vmul.f32 %v874, %v75
    %v877 = vmul.f32 %v874, %v79
    %v878 = vmul.f32 %v778, %v88
    %v879 = vmul.f32 %v778, %v92
    %v880 = vadd.f32 %v101, %v876
    %v881 = vadd.f32 %v105, %v877
    %v882 = vadd.f32 %v880, %v878
    %v883 = vadd.f32 %v881, %v879
    %v884 = vtanh.pop %v882
    %v885 = vtanh.pop %v883
    %v886 = vmul.f32 %v884, 0.5
    %v887 = vmul.f32 %v885, 0.5
    %v888 = vadd.f32 %v886, 0.5
    %v889 = vadd.f32 %v887, 0.5
    %v890 = vmul.f32 %v888, %v768
    %v891 = vmul.f32 %v888, %v885
    %893 = vrot.lane.b32.xlu0 %v891, 64
    %v894 = vpop.permute.xlu0 %893
    %v896 = vadd.f32 %v890, %v894
    %v897 = vtanh.pop %v896
    %v898 = vmul.f32 %v889, %v897
    %v899 = vmul.f32 %v898, %v133
    %901 = vrot.lane.b32.xlu0 %v899, 64
    %v902 = vpop.permute.xlu0 %901
    %v904 = vsel %vm140, %v902, 0.0
    %905 = vadd.xlane.f32.xlu0 %v904
    %v906 = vpop.xlane.xlu0 %905
    %v907 = vmul.f32 %v906, %v148
    %v908 = vmul.f32 %v906, %v152
    %v909 = vmul.f32 %v809, %v161
    %v910 = vmul.f32 %v809, %v165
    %v911 = vadd.f32 %v174, %v907
    %v912 = vadd.f32 %v178, %v908
    %v913 = vadd.f32 %v911, %v909
    %v914 = vadd.f32 %v912, %v910
    %v915 = vtanh.pop %v913
    %v916 = vtanh.pop %v914
    %v917 = vmul.f32 %v915, 0.5
    %v918 = vmul.f32 %v916, 0.5
    %v919 = vadd.f32 %v917, 0.5
    %v920 = vadd.f32 %v918, 0.5
    %v921 = vmul.f32 %v919, %v799
    %v922 = vmul.f32 %v919, %v916
    %924 = vrot.lane.b32.xlu0 %v922, 64
    %v925 = vpop.permute.xlu0 %924
    %v927 = vadd.f32 %v921, %v925
    %v928 = vtanh.pop %v927
    %v929 = vmul.f32 %v920, %v928
    %v930 = vmul.f32 %v929, %v206
    %932 = vrot.lane.b32.xlu0 %v930, 64
    %v933 = vpop.permute.xlu0 %932
    %v935 = vsel %vm140, %v933, 0.0
    %936 = vadd.xlane.f32.xlu0 %v935
    %v937 = vpop.xlane.xlu0 %936
    %v938 = vmul.f32 %v937, %v220
    %v939 = vmul.f32 %v937, %v224
    %v940 = vmul.f32 %v840, %v233
    %v941 = vmul.f32 %v840, %v237
    %v942 = vadd.f32 %v246, %v938
    %v943 = vadd.f32 %v250, %v939
    %v944 = vadd.f32 %v942, %v940
    %v945 = vadd.f32 %v943, %v941
    %v946 = vtanh.pop %v944
    %v947 = vtanh.pop %v945
    %v948 = vmul.f32 %v946, 0.5
    %v949 = vmul.f32 %v947, 0.5
    %v950 = vadd.f32 %v948, 0.5
    %v951 = vadd.f32 %v949, 0.5
    %v952 = vmul.f32 %v950, %v830
    %v953 = vmul.f32 %v950, %v947
    %955 = vrot.lane.b32.xlu0 %v953, 64
    %v956 = vpop.permute.xlu0 %955
    %v958 = vadd.f32 %v952, %v956
    %v959 = vtanh.pop %v958
    %v960 = vmul.f32 %v951, %v959
    %v961 = vmul.f32 %v960, %v278
    %963 = vrot.lane.b32.xlu0 %v961, 64
    %v964 = vpop.permute.xlu0 %963
    %v966 = vsel %vm140, %v964, 0.0
    %967 = vadd.xlane.f32.xlu0 %v966
    %v968 = vpop.xlane.xlu0 %967
    %v969 = vmul.f32 %v968, %v292
    %v970 = vmul.f32 %v968, %v296
    %v971 = vmul.f32 %v871, %v305
    %v972 = vmul.f32 %v871, %v309
    %v973 = vadd.f32 %v318, %v969
    %v974 = vadd.f32 %v322, %v970
    %v975 = vadd.f32 %v973, %v971
    %v976 = vadd.f32 %v974, %v972
    %v977 = vtanh.pop %v975
    %v978 = vtanh.pop %v976
    %v979 = vmul.f32 %v977, 0.5
    %v980 = vmul.f32 %v978, 0.5
    %v981 = vadd.f32 %v979, 0.5
    %v982 = vadd.f32 %v980, 0.5
    %v983 = vmul.f32 %v981, %v861
    %v984 = vmul.f32 %v981, %v978
    %986 = vrot.lane.b32.xlu0 %v984, 64
    %v987 = vpop.permute.xlu0 %986
    %v989 = vadd.f32 %v983, %v987
    %v990 = vtanh.pop %v989
    %v991 = vmul.f32 %v982, %v990
    %v992 = vmul.f32 %v991, %v350
    %994 = vrot.lane.b32.xlu0 %v992, 64
    %v995 = vpop.permute.xlu0 %994
    %v997 = vsel %vm140, %v995, 0.0
    %998 = vadd.xlane.f32.xlu0 %v997
    %v999 = vpop.xlane.xlu0 %998
    %1000 = vset.pattern.permute.xlu0 6
    %1001 = vperm.xlu0 %1000, %v49
    %v1002 = vpop.permute.xlu0 %1001
    %v1004 = vmul.f32 %v1002, %v75
    %v1005 = vmul.f32 %v1002, %v79
    %v1006 = vmul.f32 %v906, %v88
    %v1007 = vmul.f32 %v906, %v92
    %v1008 = vadd.f32 %v101, %v1004
    %v1009 = vadd.f32 %v105, %v1005
    %v1010 = vadd.f32 %v1008, %v1006
    %v1011 = vadd.f32 %v1009, %v1007
    %v1012 = vtanh.pop %v1010
    %v1013 = vtanh.pop %v1011
    %v1014 = vmul.f32 %v1012, 0.5
    %v1015 = vmul.f32 %v1013, 0.5
    %v1016 = vadd.f32 %v1014, 0.5
    %v1017 = vadd.f32 %v1015, 0.5
    %v1018 = vmul.f32 %v1016, %v896
    %v1019 = vmul.f32 %v1016, %v1013
    %1021 = vrot.lane.b32.xlu0 %v1019, 64
    %v1022 = vpop.permute.xlu0 %1021
    %v1024 = vadd.f32 %v1018, %v1022
    %v1025 = vtanh.pop %v1024
    %v1026 = vmul.f32 %v1017, %v1025
    %v1027 = vmul.f32 %v1026, %v133
    %1029 = vrot.lane.b32.xlu0 %v1027, 64
    %v1030 = vpop.permute.xlu0 %1029
    %v1032 = vsel %vm140, %v1030, 0.0
    %1033 = vadd.xlane.f32.xlu0 %v1032
    %v1034 = vpop.xlane.xlu0 %1033
    %v1035 = vmul.f32 %v1034, %v148
    %v1036 = vmul.f32 %v1034, %v152
    %v1037 = vmul.f32 %v937, %v161
    %v1038 = vmul.f32 %v937, %v165
    %v1039 = vadd.f32 %v174, %v1035
    %v1040 = vadd.f32 %v178, %v1036
    %v1041 = vadd.f32 %v1039, %v1037
    %v1042 = vadd.f32 %v1040, %v1038
    %v1043 = vtanh.pop %v1041
    %v1044 = vtanh.pop %v1042
    %v1045 = vmul.f32 %v1043, 0.5
    %v1046 = vmul.f32 %v1044, 0.5
    %v1047 = vadd.f32 %v1045, 0.5
    %v1048 = vadd.f32 %v1046, 0.5
    %v1049 = vmul.f32 %v1047, %v927
    %v1050 = vmul.f32 %v1047, %v1044
    %1052 = vrot.lane.b32.xlu0 %v1050, 64
    %v1053 = vpop.permute.xlu0 %1052
    %v1055 = vadd.f32 %v1049, %v1053
    %v1056 = vtanh.pop %v1055
    %v1057 = vmul.f32 %v1048, %v1056
    %v1058 = vmul.f32 %v1057, %v206
    %1060 = vrot.lane.b32.xlu0 %v1058, 64
    %v1061 = vpop.permute.xlu0 %1060
    %v1063 = vsel %vm140, %v1061, 0.0
    %1064 = vadd.xlane.f32.xlu0 %v1063
    %v1065 = vpop.xlane.xlu0 %1064
    %v1066 = vmul.f32 %v1065, %v220
    %v1067 = vmul.f32 %v1065, %v224
    %v1068 = vmul.f32 %v968, %v233
    %v1069 = vmul.f32 %v968, %v237
    %v1070 = vadd.f32 %v246, %v1066
    %v1071 = vadd.f32 %v250, %v1067
    %v1072 = vadd.f32 %v1070, %v1068
    %v1073 = vadd.f32 %v1071, %v1069
    %v1074 = vtanh.pop %v1072
    %v1075 = vtanh.pop %v1073
    %v1076 = vmul.f32 %v1074, 0.5
    %v1077 = vmul.f32 %v1075, 0.5
    %v1078 = vadd.f32 %v1076, 0.5
    %v1079 = vadd.f32 %v1077, 0.5
    %v1080 = vmul.f32 %v1078, %v958
    %v1081 = vmul.f32 %v1078, %v1075
    %1083 = vrot.lane.b32.xlu0 %v1081, 64
    %v1084 = vpop.permute.xlu0 %1083
    %v1086 = vadd.f32 %v1080, %v1084
    %v1087 = vtanh.pop %v1086
    %v1088 = vmul.f32 %v1079, %v1087
    %v1089 = vmul.f32 %v1088, %v278
    %1091 = vrot.lane.b32.xlu0 %v1089, 64
    %v1092 = vpop.permute.xlu0 %1091
    %v1094 = vsel %vm140, %v1092, 0.0
    %1095 = vadd.xlane.f32.xlu0 %v1094
    %v1096 = vpop.xlane.xlu0 %1095
    %v1097 = vmul.f32 %v1096, %v292
    %v1098 = vmul.f32 %v1096, %v296
    %v1099 = vmul.f32 %v999, %v305
    %v1100 = vmul.f32 %v999, %v309
    %v1101 = vadd.f32 %v318, %v1097
    %v1102 = vadd.f32 %v322, %v1098
    %v1103 = vadd.f32 %v1101, %v1099
    %v1104 = vadd.f32 %v1102, %v1100
    %v1105 = vtanh.pop %v1103
    %v1106 = vtanh.pop %v1104
    %v1107 = vmul.f32 %v1105, 0.5
    %v1108 = vmul.f32 %v1106, 0.5
    %v1109 = vadd.f32 %v1107, 0.5
    %v1110 = vadd.f32 %v1108, 0.5
    %v1111 = vmul.f32 %v1109, %v989
    %v1112 = vmul.f32 %v1109, %v1106
    %1114 = vrot.lane.b32.xlu0 %v1112, 64
    %v1115 = vpop.permute.xlu0 %1114
    %v1117 = vadd.f32 %v1111, %v1115
    %v1118 = vtanh.pop %v1117
    %v1119 = vmul.f32 %v1110, %v1118
    %v1120 = vmul.f32 %v1119, %v350
    %1122 = vrot.lane.b32.xlu0 %v1120, 64
    %v1123 = vpop.permute.xlu0 %1122
    %v1125 = vsel %vm140, %v1123, 0.0
    %1126 = vadd.xlane.f32.xlu0 %v1125
    %v1127 = vpop.xlane.xlu0 %1126
    %1128 = vset.pattern.permute.xlu0 7
    %1129 = vperm.xlu0 %1128, %v49
    %v1130 = vpop.permute.xlu0 %1129
    %v1132 = vmul.f32 %v1130, %v75
    %v1133 = vmul.f32 %v1130, %v79
    %v1134 = vmul.f32 %v1034, %v88
    %v1135 = vmul.f32 %v1034, %v92
    %v1136 = vadd.f32 %v101, %v1132
    %v1137 = vadd.f32 %v105, %v1133
    %v1138 = vadd.f32 %v1136, %v1134
    %v1139 = vadd.f32 %v1137, %v1135
    %v1140 = vtanh.pop %v1138
    %v1141 = vtanh.pop %v1139
    %v1142 = vmul.f32 %v1140, 0.5
    %v1143 = vmul.f32 %v1141, 0.5
    %v1144 = vadd.f32 %v1142, 0.5
    %v1145 = vadd.f32 %v1143, 0.5
    %v1146 = vmul.f32 %v1144, %v1024
    %v1147 = vmul.f32 %v1144, %v1141
    %1149 = vrot.lane.b32.xlu0 %v1147, 64
    %v1150 = vpop.permute.xlu0 %1149
    %v1152 = vadd.f32 %v1146, %v1150
    %v1153 = vtanh.pop %v1152
    %v1154 = vmul.f32 %v1145, %v1153
    %v1155 = vmul.f32 %v1154, %v133
    %1157 = vrot.lane.b32.xlu0 %v1155, 64
    %v1158 = vpop.permute.xlu0 %1157
    %v1160 = vsel %vm140, %v1158, 0.0
    %1161 = vadd.xlane.f32.xlu0 %v1160
    %v1162 = vpop.xlane.xlu0 %1161
    %v1163 = vmul.f32 %v1162, %v148
    %v1164 = vmul.f32 %v1162, %v152
    %v1165 = vmul.f32 %v1065, %v161
    %v1166 = vmul.f32 %v1065, %v165
    %v1167 = vadd.f32 %v174, %v1163
    %v1168 = vadd.f32 %v178, %v1164
    %v1169 = vadd.f32 %v1167, %v1165
    %v1170 = vadd.f32 %v1168, %v1166
    %v1171 = vtanh.pop %v1169
    %v1172 = vtanh.pop %v1170
    %v1173 = vmul.f32 %v1171, 0.5
    %v1174 = vmul.f32 %v1172, 0.5
    %v1175 = vadd.f32 %v1173, 0.5
    %v1176 = vadd.f32 %v1174, 0.5
    %v1177 = vmul.f32 %v1175, %v1055
    %v1178 = vmul.f32 %v1175, %v1172
    %1180 = vrot.lane.b32.xlu0 %v1178, 64
    %v1181 = vpop.permute.xlu0 %1180
    %v1183 = vadd.f32 %v1177, %v1181
    %v1184 = vtanh.pop %v1183
    %v1185 = vmul.f32 %v1176, %v1184
    %v1186 = vmul.f32 %v1185, %v206
    %1188 = vrot.lane.b32.xlu0 %v1186, 64
    %v1189 = vpop.permute.xlu0 %1188
    %v1191 = vsel %vm140, %v1189, 0.0
    %1192 = vadd.xlane.f32.xlu0 %v1191
    %v1193 = vpop.xlane.xlu0 %1192
    %v1194 = vmul.f32 %v1193, %v220
    %v1195 = vmul.f32 %v1193, %v224
    %v1196 = vmul.f32 %v1096, %v233
    %v1197 = vmul.f32 %v1096, %v237
    %v1198 = vadd.f32 %v246, %v1194
    %v1199 = vadd.f32 %v250, %v1195
    %v1200 = vadd.f32 %v1198, %v1196
    %v1201 = vadd.f32 %v1199, %v1197
    %v1202 = vtanh.pop %v1200
    %v1203 = vtanh.pop %v1201
    %v1204 = vmul.f32 %v1202, 0.5
    %v1205 = vmul.f32 %v1203, 0.5
    %v1206 = vadd.f32 %v1204, 0.5
    %v1207 = vadd.f32 %v1205, 0.5
    %v1208 = vmul.f32 %v1206, %v1086
    %v1209 = vmul.f32 %v1206, %v1203
    %1211 = vrot.lane.b32.xlu0 %v1209, 64
    %v1212 = vpop.permute.xlu0 %1211
    %v1214 = vadd.f32 %v1208, %v1212
    %v1215 = vtanh.pop %v1214
    %v1216 = vmul.f32 %v1207, %v1215
    %v1217 = vmul.f32 %v1216, %v278
    %1219 = vrot.lane.b32.xlu0 %v1217, 64
    %v1220 = vpop.permute.xlu0 %1219
    %v1222 = vsel %vm140, %v1220, 0.0
    %1223 = vadd.xlane.f32.xlu0 %v1222
    %v1224 = vpop.xlane.xlu0 %1223
    %v1225 = vmul.f32 %v1224, %v292
    %v1226 = vmul.f32 %v1224, %v296
    %v1227 = vmul.f32 %v1127, %v305
    %v1228 = vmul.f32 %v1127, %v309
    %v1229 = vadd.f32 %v318, %v1225
    %v1230 = vadd.f32 %v322, %v1226
    %v1231 = vadd.f32 %v1229, %v1227
    %v1232 = vadd.f32 %v1230, %v1228
    %v1233 = vtanh.pop %v1231
    %v1234 = vtanh.pop %v1232
    %v1235 = vmul.f32 %v1233, 0.5
    %v1236 = vmul.f32 %v1234, 0.5
    %v1237 = vadd.f32 %v1235, 0.5
    %v1238 = vadd.f32 %v1236, 0.5
    %v1239 = vmul.f32 %v1237, %v1117
    %v1240 = vmul.f32 %v1237, %v1234
    %1242 = vrot.lane.b32.xlu0 %v1240, 64
    %v1243 = vpop.permute.xlu0 %1242
    %v1245 = vadd.f32 %v1239, %v1243
    %v1246 = vtanh.pop %v1245
    %v1247 = vmul.f32 %v1238, %v1246
    %v1248 = vmul.f32 %v1247, %v350
    %1250 = vrot.lane.b32.xlu0 %v1248, 64
    %v1251 = vpop.permute.xlu0 %1250
    %v1253 = vsel %vm140, %v1251, 0.0
    %1254 = vadd.xlane.f32.xlu0 %v1253
    %v1255 = vpop.xlane.xlu0 %1254
    %vm1256 = vcmask 7168
    %v1257 = vsel %vm1256, %v487, %v615
    %vm1258 = vcmask 15360
    %v1259 = vsel %vm1258, %v1257, %v743
    %vm1260 = vcmask 23552
    %v1261 = vsel %vm1260, %v1259, %v871
    %vm1262 = vcmask 31744
    %v1263 = vsel %vm1262, %v1261, %v999
    %vm1264 = vcmask 39936
    %v1265 = vsel %vm1264, %v1263, %v1127
    %vm1266 = vcmask 48128
    %v1267 = vsel %vm1266, %v1265, %v1255
    %vm1268 = vcmask 50176
    %1269 = vst.msk [vmem:[#allocation7] sm:$0x3] %vm1268, %v1267
    // Predicated region
    $region30: #{lstm_benchmark_forward.1} parent=1 // pred_check
      _
    $region31: #{lstm_benchmark_forward.1} parent=1 // pred_check_branch
      %1271 = sbr.rel (0) target = $region33
    $region32: #{lstm_benchmark_forward.1} parent=1 // pred_region
      %s1273 = ssub.s32 32, 32
      %1274 = vsyncadd [#allocation4], %s1273
      %s1276 = sshll.u32 [#allocation7], 4
      %s1277 = int_to_ptr.vmem [resolvable:$true] %s1276
      %1279 = dma.vmem_to_hbm [thread:$0]  %s1277, 32, %s5, [#allocation4]
    $region33: #{lstm_benchmark_forward.1} parent=1 // pred_fallthru
      _
    // Predicated region
    $region34: #{lstm_benchmark_forward.1} parent=1 // pred_check
      _
    $region35: #{lstm_benchmark_forward.1} parent=1 // pred_check_branch
      %1281 = sbr.rel (0) target = $region37
    $region36: #{lstm_benchmark_forward.1} parent=1 // pred_region
      %1282 = dma.done [#allocation4], 32
    $region37: #{lstm_benchmark_forward.1} parent=1 // pred_fallthru
      _
    %1283 = vsyncpa [#allocation3], 1
    %1284 = vsyncpa [#allocation6], 1
    %1285 = vsyncpa [#allocation4], 1

</llo_original>
